<compile_context>
chip_gen: v7x
topology: tpu7x:2x2x1
jax: 0.10.0
libtpu: 0.0.40
codegen_flags: <defaults>
</compile_context>

<pallas_src>
import math

import jax
import jax.numpy as jnp
from jax import lax
from jax.experimental import pallas as pl
from jax.experimental.pallas import tpu as pltpu
import numpy as np

_EPS = 1e-8
_UNROLL_MAX_T = 64   # fully unroll the recurrence for short sequences


# ----------------------------------------------------------------------------
# Fused stage: LSTM (gate order reordered to i,f,o,g) + Linear + GroupNorm(1)
# + affine + residual.  Batch is folded into the row dimension; one invocation.
# ----------------------------------------------------------------------------
def _dprnn_stage(x_trn, num_batches, wih_t, whh_t, bias, wlin_t, blin, gamma, beta):
    # x_trn: (T, R, N) f32 time-major; R = num_batches * rows_per_batch and each
    # batch element's rows are contiguous along R.  Returns (T, R, N) f32.
    T, R, N = x_trn.shape
    H = whh_t.shape[0]
    assert R % num_batches == 0
    rp = R // num_batches
    # Soft alignment expectations: R % 8 == 0 keeps the (T,R,N)<->(T*R,N)
    # reshapes layout-preserving; rp % 8 == 0 keeps per-batch row slices
    # sublane-aligned.  Violations still lower, just with relayout cost.

    def kernel(x_ref, wih_ref, whh_ref, b_ref, wlin_ref, blin_ref,
               gamma_ref, beta_ref, o_ref, gx_sc, hall_sc):
        # ---- 1) hoisted input projection: one big MXU matmul ----------------
        x2d = x_ref[...].reshape(T * R, N).astype(jnp.bfloat16)
        gx_sc[...] = (jnp.dot(x2d, wih_ref[...], preferred_element_type=jnp.float32)
                      + b_ref[...])
        # x value is dead here; the residual re-reads x_ref in the tail.

        # ---- 2) recurrence: only h @ W_hh stays on the serial critical path --
        # Gate column order after the offline reorder: [i, f, o, g].
        def step(t, carry):
            h, c = carry
            row0 = t * R
            if not isinstance(t, int):
                row0 = pl.multiple_of(row0, R)
            gates = gx_sc[pl.ds(row0, R), :] + jnp.dot(
                h.astype(jnp.bfloat16), whh_ref[...],
                preferred_element_type=jnp.float32)
            sig = jax.nn.sigmoid(gates[:, :3 * H])     # i, f, o in one EUP pass
            g = jnp.tanh(gates[:, 3 * H:])
            c = sig[:, H:2 * H] * c + sig[:, :H] * g
            h = sig[:, 2 * H:3 * H] * jnp.tanh(c)
            hall_sc[pl.ds(row0, R), :] = h.astype(jnp.bfloat16)
            return (h, c)

        h0 = jnp.zeros((R, H), jnp.float32)
        c0 = jnp.zeros((R, H), jnp.float32)
        if T <= _UNROLL_MAX_T:
            carry = (h0, c0)
            for t in range(T):        # static unroll: scheduler sees across steps
                carry = step(t, carry)
        else:
            # TODO(synk): long-sequence path is not exercised by the test below;
            # verify dynamic gx_sc/hall_sc indexing inside fori_loop on target HW.
            lax.fori_loop(0, T, step, (h0, c0), unroll=8)

        # ---- 3) deferred output Linear: one big matmul -----------------------
        y2d = (jnp.dot(hall_sc[...], wlin_ref[...],
                       preferred_element_type=jnp.float32) + blin_ref[...])
        y = y2d.reshape(T, R, N)       # tile-aligned split of the row dimension

        # ---- 4) GroupNorm(1, N) per batch (two-pass) + affine + residual -----
        inv_cnt = 1.0 / float(T * rp * N)
        for b in range(num_batches):   # static loop; rows per batch contiguous
            lo, hi = b * rp, (b + 1) * rp
            yb = y[:, lo:hi, :]
            mean = jnp.sum(yb) * inv_cnt
            cen = yb - mean
            var = jnp.sum(cen * cen) * inv_cnt        # two-pass: no cancellation
            o_ref[:, lo:hi, :] = (cen * lax.rsqrt(var + _EPS) * gamma_ref[...]
                                  + beta_ref[...] + x_ref[:, lo:hi, :])
        # TODO(synk): lane-dense (T, R*N) output slab would require a
        # sublane->lane relayout of the matmul-layout result; evaluate on HW.
        # TODO(synk): hold W_hh in MXU weight regs across the unrolled loop via
        # pltpu.matmul_push_rhs / matmul_acc_lhs / matmul_pop.

    flops = (2 * T * R * (N * 4 * H + H * 4 * H + H * N)
             + 12 * T * R * H + 10 * T * R * N)
    transcendentals = 5 * T * R * H
    bytes_accessed = (2 * 4 * T * R * N                        # x in + out
                      + 2 * (N * 4 * H + H * 4 * H + H * N)    # bf16 weights
                      + 4 * (4 * H + 3 * N))                   # biases / affine

    return pl.pallas_call(
        kernel,
        out_shape=jax.ShapeDtypeStruct((T, R, N), jnp.float32),
        grid=(1,),
        in_specs=[
            pl.BlockSpec((T, R, N), lambda i: (0, 0, 0)),
            pl.BlockSpec(wih_t.shape, lambda i: (0, 0)),
            pl.BlockSpec(whh_t.shape, lambda i: (0, 0)),
            pl.BlockSpec(bias.shape, lambda i: (0, 0)),
            pl.BlockSpec(wlin_t.shape, lambda i: (0, 0)),
            pl.BlockSpec(blin.shape, lambda i: (0, 0)),
            pl.BlockSpec(gamma.shape, lambda i: (0, 0)),
            pl.BlockSpec(beta.shape, lambda i: (0, 0)),
        ],
        out_specs=pl.BlockSpec((T, R, N), lambda i: (0, 0, 0)),
        scratch_shapes=[pltpu.VMEM((T * R, 4 * H), jnp.float32),    # gates_x
                        pltpu.VMEM((T * R, H), jnp.bfloat16)],      # all h states
        compiler_params=pltpu.CompilerParams(
            dimension_semantics=("arbitrary",),
            # <= physical VMEM on every generation (v7x has 64 MiB).
            vmem_limit_bytes=64 * 1024 * 1024),
        cost_estimate=pl.CostEstimate(flops=flops,
                                      transcendentals=transcendentals,
                                      bytes_accessed=bytes_accessed),
        # TODO(synk): at production sizes, add a row-chunk grid axis (keeping
        # each batch's rows inside one chunk) so blocks fit v7x's 64 MiB VMEM
        # and >=2 blocks per TensorCore pipeline the HBM<->VMEM DMA.
    )(x_trn, wih_t, whh_t, bias, wlin_t, blin, gamma, beta)


# ----------------------------------------------------------------------------
# Parameter prep: transpose weights, merge biases, reorder gates i,f,g,o ->
# i,f,o,g so the three sigmoid gates are lane-contiguous inside the kernel.
# ----------------------------------------------------------------------------
def _prep_stage_params(p, prefix):
    wih = p[prefix + '_wih']                      # (4H, N), PyTorch order i,f,g,o
    whh = p[prefix + '_whh']                      # (4H, H)
    b = p[prefix + '_bih'] + p[prefix + '_bhh']   # (4H,)
    H = whh.shape[1]

    def reorder(w):                               # gate blocks i,f,g,o -> i,f,o,g
        w4 = w.reshape((4, H) + w.shape[1:])
        return jnp.concatenate([w4[0], w4[1], w4[3], w4[2]], axis=0)

    return (reorder(wih).T.astype(jnp.bfloat16),             # (N, 4H)
            reorder(whh).T.astype(jnp.bfloat16),             # (H, 4H)
            reorder(b)[None, :].astype(jnp.float32),         # (1, 4H)
            p[prefix + '_wlin'].T.astype(jnp.bfloat16),      # (H, N)
            p[prefix + '_blin'][None, :].astype(jnp.float32),
            p[prefix + '_gamma'][None, :].astype(jnp.float32),
            p[prefix + '_beta'][None, :].astype(jnp.float32))


# ----------------------------------------------------------------------------
# Full Dual_RNN_Block forward (Pallas).  x: (B, N, K, S) -> (B, N, K, S)
# ----------------------------------------------------------------------------
def dual_rnn_block_pallas(x, p):
    B, N, K, S = x.shape
    # intra: LSTM rows = (b, s), time = K; rows grouped by batch element.
    x_intra = jnp.transpose(x, (2, 0, 3, 1)).reshape(K, B * S, N)      # (K, B*S, N)
    y_intra = _dprnn_stage(x_intra, B, *_prep_stage_params(p, 'intra'))

    # inter: LSTM rows = (b, k), time = S.
    # TODO(synk): fold this transpose into the inter kernel's index_map to save
    # one HBM round trip of the activation tensor between stages.
    x_inter = jnp.transpose(y_intra.reshape(K, B, S, N),
                            (2, 1, 0, 3)).reshape(S, B * K, N)          # (S, B*K, N)
    y_inter = _dprnn_stage(x_inter, B, *_prep_stage_params(p, 'inter'))

    return jnp.transpose(y_inter.reshape(S, B, K, N), (1, 3, 2, 0))     # (B, N, K, S)


# ----------------------------------------------------------------------------
# Pure-JAX f32 reference (mirrors the PyTorch forward exactly) for validation.
# ----------------------------------------------------------------------------
def _lstm_ref(x_btn, wih, whh, bih, bhh):
    batch, T, N = x_btn.shape
    H = whh.shape[1]

    def step(carry, x_t):
        h, c = carry
        gates = x_t @ wih.T + bih + h @ whh.T + bhh
        i, f, g, o = jnp.split(gates, 4, axis=-1)
        i, f, o = jax.nn.sigmoid(i), jax.nn.sigmoid(f), jax.nn.sigmoid(o)
        g = jnp.tanh(g)
        c = f * c + i * g
        h = o * jnp.tanh(c)
        return (h, c), h

    h0 = jnp.zeros((batch, H), jnp.float32)
    c0 = jnp.zeros((batch, H), jnp.float32)
    _, ys = lax.scan(step, (h0, c0), jnp.transpose(x_btn, (1, 0, 2)))
    return jnp.transpose(ys, (1, 0, 2))


def _gn_ref(x, gamma, beta, eps=1e-8):     # x: (B, N, K, S)
    mean = jnp.mean(x, axis=(1, 2, 3), keepdims=True)
    var = jnp.mean((x - mean) ** 2, axis=(1, 2, 3), keepdims=True)
    return ((x - mean) / jnp.sqrt(var + eps)) * gamma[None, :, None, None] \
           + beta[None, :, None, None]


def dual_rnn_block_ref(x, p):
    B, N, K, S = x.shape
    intra_in = jnp.transpose(x, (0, 3, 2, 1)).reshape(B * S, K, N)
    h = _lstm_ref(intra_in, p['intra_wih'], p['intra_whh'], p['intra_bih'], p['intra_bhh'])
    y = h @ p['intra_wlin'].T + p['intra_blin']
    y = jnp.transpose(y.reshape(B, S, K, N), (0, 3, 2, 1))
    intra = _gn_ref(y, p['intra_gamma'], p['intra_beta']) + x

    inter_in = jnp.transpose(intra, (0, 2, 3, 1)).reshape(B * K, S, N)
    h = _lstm_ref(inter_in, p['inter_wih'], p['inter_whh'], p['inter_bih'], p['inter_bhh'])
    y = h @ p['inter_wlin'].T + p['inter_blin']
    y = jnp.transpose(y.reshape(B, K, S, N), (0, 3, 1, 2))
    return _gn_ref(y, p['inter_gamma'], p['inter_beta']) + intra


# ----------------------------------------------------------------------------
if __name__ == "__main__":
    B, N, K, S = 2, 16, 8, 8          # out_channels = N = 16
    H = 32                            # hidden_channels

    key = jax.random.PRNGKey(0)
    keys = jax.random.split(key, 17)
    std = 1.0 / math.sqrt(H)

    def u(k, shape, scale=std):
        return jax.random.uniform(k, shape, jnp.float32, -scale, scale)

    params = dict(
        intra_wih=u(keys[0], (4 * H, N)), intra_whh=u(keys[1], (4 * H, H)),
        intra_bih=u(keys[2], (4 * H,)),  intra_bhh=u(keys[3], (4 * H,)),
        intra_wlin=u(keys[4], (N, H)),   intra_blin=u(keys[5], (N,)),
        intra_gamma=1.0 + 0.1 * u(keys[6], (N,), 1.0),
        intra_beta=0.1 * u(keys[7], (N,), 1.0),
        inter_wih=u(keys[8], (4 * H, N)), inter_whh=u(keys[9], (4 * H, H)),
        inter_bih=u(keys[10], (4 * H,)), inter_bhh=u(keys[11], (4 * H,)),
        inter_wlin=u(keys[12], (N, H)),  inter_blin=u(keys[13], (N,)),
        inter_gamma=1.0 + 0.1 * u(keys[14], (N,), 1.0),
        inter_beta=0.1 * u(keys[15], (N,), 1.0),
    )

    x = jax.random.normal(keys[16], (B, N, K, S), jnp.float32)

    out = jax.jit(dual_rnn_block_pallas)(x, params)
    out = jax.block_until_ready(out)

    ref = jax.block_until_ready(dual_rnn_block_ref(x, params))
    # Tolerance widened vs a pure-f32 path because matmul operands are bf16
    # (f32 accumulate / f32 state / f32 GroupNorm); structural errors >> 5e-2.
    np.testing.assert_allclose(np.asarray(out), np.asarray(ref), rtol=5e-2, atol=5e-2)

    print("KERNEL_OK")
</pallas_src>

<mosaic_0001>
module attributes {stable_mosaic.version = 11 : i64} {
  func.func @kernel(%arg0: i32, %arg1: memref<8x16x16xf32, #tpu.memory_space<vmem>>, %arg2: memref<16x128xbf16, #tpu.memory_space<vmem>>, %arg3: memref<32x128xbf16, #tpu.memory_space<vmem>>, %arg4: memref<1x128xf32, #tpu.memory_space<vmem>>, %arg5: memref<32x16xbf16, #tpu.memory_space<vmem>>, %arg6: memref<1x16xf32, #tpu.memory_space<vmem>>, %arg7: memref<1x16xf32, #tpu.memory_space<vmem>>, %arg8: memref<1x16xf32, #tpu.memory_space<vmem>>, %arg9: memref<8x16x16xf32, #tpu.memory_space<vmem>>, %arg10: memref<128x128xf32, #tpu.memory_space<vmem>>, %arg11: memref<128x32xbf16, #tpu.memory_space<vmem>>) attributes {dimension_semantics = [#tpu.dimension_semantics<arbitrary>], iteration_bounds = array<i64: 1>, scalar_prefetch = 0 : i64, scratch_operands = 2 : i64, tpu.core_type = #tpu.core_type<tc>, window_params = [{pipeline_mode = #tpu.pipeline_mode<synchronous>, transform_indices = @transform_0, window_bounds = array<i64: 8, 16, 16>}, {pipeline_mode = #tpu.pipeline_mode<synchronous>, transform_indices = @transform_1, window_bounds = array<i64: 16, 128>}, {pipeline_mode = #tpu.pipeline_mode<synchronous>, transform_indices = @transform_2, window_bounds = array<i64: 32, 128>}, {pipeline_mode = #tpu.pipeline_mode<synchronous>, transform_indices = @transform_3, window_bounds = array<i64: 1, 128>}, {pipeline_mode = #tpu.pipeline_mode<synchronous>, transform_indices = @transform_4, window_bounds = array<i64: 32, 16>}, {pipeline_mode = #tpu.pipeline_mode<synchronous>, transform_indices = @transform_5, window_bounds = array<i64: 1, 16>}, {pipeline_mode = #tpu.pipeline_mode<synchronous>, transform_indices = @transform_6, window_bounds = array<i64: 1, 16>}, {pipeline_mode = #tpu.pipeline_mode<synchronous>, transform_indices = @transform_7, window_bounds = array<i64: 1, 16>}, {pipeline_mode = #tpu.pipeline_mode<synchronous>, transform_indices = @transform_8, window_bounds = array<i64: 8, 16, 16>}]} {
    %c0 = arith.constant 0 : index
    %c0_0 = arith.constant 0 : index
    %c0_1 = arith.constant 0 : index
    %0 = vector.load %arg1[%c0, %c0_0, %c0_1] : memref<8x16x16xf32, #tpu.memory_space<vmem>>, vector<8x16x16xf32>
    %1 = vector.shape_cast %0 : vector<8x16x16xf32> to vector<128x16xf32>
    %2 = arith.truncf %1 : vector<128x16xf32> to vector<128x16xbf16>
    %c0_2 = arith.constant 0 : index
    %c0_3 = arith.constant 0 : index
    %3 = vector.load %arg2[%c0_2, %c0_3] : memref<16x128xbf16, #tpu.memory_space<vmem>>, vector<16x128xbf16>
    %cst = arith.constant dense<0.000000e+00> : vector<128x128xf32>
    %4 = tpu.matmul %2, %3, %cst {dimension_numbers = #tpu.dot_dimension_numbers<[1], [0], [0], [1], [0, 0, 1, 1], [], []>} : vector<128x16xbf16>, vector<16x128xbf16>, vector<128x128xf32> -> vector<128x128xf32>
    %c0_4 = arith.constant 0 : index
    %c0_5 = arith.constant 0 : index
    %5 = vector.load %arg4[%c0_4, %c0_5] : memref<1x128xf32, #tpu.memory_space<vmem>>, vector<1x128xf32>
    %6 = vector.broadcast %5 : vector<1x128xf32> to vector<128x128xf32>
    %7 = arith.addf %4, %6 : vector<128x128xf32>
    %c0_6 = arith.constant 0 : index
    %c0_7 = arith.constant 0 : index
    %8 = vector.load %arg10[%c0_6, %c0_7] : memref<128x128xf32, #tpu.memory_space<vmem>>, vector<128x128xf32>
    tpu.vector_store %arg10[%c0_6, %c0_7], %7 {strides = array<i32>} : memref<128x128xf32, #tpu.memory_space<vmem>>, vector<128x128xf32>,
    %cst_8 = arith.constant 0.000000e+00 : f32
    %9 = vector.broadcast %cst_8 : f32 to vector<16x32xf32>
    %cst_9 = arith.constant 0.000000e+00 : f32
    %10 = vector.broadcast %cst_9 : f32 to vector<16x32xf32>
    %c0_10 = arith.constant 0 : index
    %c0_11 = arith.constant 0 : index
    %11 = vector.load %arg10[%c0_10, %c0_11] : memref<128x128xf32, #tpu.memory_space<vmem>>, vector<16x128xf32>
    %12 = arith.truncf %9 : vector<16x32xf32> to vector<16x32xbf16>
    %c0_12 = arith.constant 0 : index
    %c0_13 = arith.constant 0 : index
    %13 = vector.load %arg3[%c0_12, %c0_13] : memref<32x128xbf16, #tpu.memory_space<vmem>>, vector<32x128xbf16>
    %cst_14 = arith.constant dense<0.000000e+00> : vector<16x128xf32>
    %14 = tpu.matmul %12, %13, %cst_14 {dimension_numbers = #tpu.dot_dimension_numbers<[1], [0], [0], [1], [0, 0, 1, 1], [], []>} : vector<16x32xbf16>, vector<32x128xbf16>, vector<16x128xf32> -> vector<16x128xf32>
    %15 = arith.addf %11, %14 : vector<16x128xf32>
    %16 = vector.extract_strided_slice %15 {offsets = [0, 0], sizes = [16, 96], strides = [1, 1]} : vector<16x128xf32> to vector<16x96xf32>
    %17 = arith.negf %16 : vector<16x96xf32>
    %18 = math.exp %17 : vector<16x96xf32>
    %cst_15 = arith.constant 1.000000e+00 : f32
    %19 = vector.broadcast %cst_15 : f32 to vector<16x96xf32>
    %20 = arith.addf %19, %18 : vector<16x96xf32>
    %21 = arith.divf %19, %20 : vector<16x96xf32>
    %22 = vector.extract_strided_slice %15 {offsets = [0, 96], sizes = [16, 32], strides = [1, 1]} : vector<16x128xf32> to vector<16x32xf32>
    %23 = math.tanh %22 : vector<16x32xf32>
    %24 = vector.extract_strided_slice %21 {offsets = [0, 32], sizes = [16, 32], strides = [1, 1]} : vector<16x96xf32> to vector<16x32xf32>
    %25 = arith.mulf %24, %10 : vector<16x32xf32>
    %26 = vector.extract_strided_slice %21 {offsets = [0, 0], sizes = [16, 32], strides = [1, 1]} : vector<16x96xf32> to vector<16x32xf32>
    %27 = arith.mulf %26, %23 : vector<16x32xf32>
    %28 = arith.addf %25, %27 : vector<16x32xf32>
    %29 = vector.extract_strided_slice %21 {offsets = [0, 64], sizes = [16, 32], strides = [1, 1]} : vector<16x96xf32> to vector<16x32xf32>
    %30 = math.tanh %28 : vector<16x32xf32>
    %31 = arith.mulf %29, %30 : vector<16x32xf32>
    %32 = arith.truncf %31 : vector<16x32xf32> to vector<16x32xbf16>
    %c0_16 = arith.constant 0 : index
    %c0_17 = arith.constant 0 : index
    %33 = vector.load %arg11[%c0_16, %c0_17] : memref<128x32xbf16, #tpu.memory_space<vmem>>, vector<16x32xbf16>
    tpu.vector_store %arg11[%c0_16, %c0_17], %32 {strides = array<i32>} : memref<128x32xbf16, #tpu.memory_space<vmem>>, vector<16x32xbf16>,
    %c16 = arith.constant 16 : index
    %c0_18 = arith.constant 0 : index
    %34 = vector.load %arg10[%c16, %c0_18] : memref<128x128xf32, #tpu.memory_space<vmem>>, vector<16x128xf32>
    %35 = arith.truncf %31 : vector<16x32xf32> to vector<16x32xbf16>
    %c0_19 = arith.constant 0 : index
    %c0_20 = arith.constant 0 : index
    %36 = vector.load %arg3[%c0_19, %c0_20] : memref<32x128xbf16, #tpu.memory_space<vmem>>, vector<32x128xbf16>
    %cst_21 = arith.constant dense<0.000000e+00> : vector<16x128xf32>
    %37 = tpu.matmul %35, %36, %cst_21 {dimension_numbers = #tpu.dot_dimension_numbers<[1], [0], [0], [1], [0, 0, 1, 1], [], []>} : vector<16x32xbf16>, vector<32x128xbf16>, vector<16x128xf32> -> vector<16x128xf32>
    %38 = arith.addf %34, %37 : vector<16x128xf32>
    %39 = vector.extract_strided_slice %38 {offsets = [0, 0], sizes = [16, 96], strides = [1, 1]} : vector<16x128xf32> to vector<16x96xf32>
    %40 = arith.negf %39 : vector<16x96xf32>
    %41 = math.exp %40 : vector<16x96xf32>
    %cst_22 = arith.constant 1.000000e+00 : f32
    %42 = vector.broadcast %cst_22 : f32 to vector<16x96xf32>
    %43 = arith.addf %42, %41 : vector<16x96xf32>
    %44 = arith.divf %42, %43 : vector<16x96xf32>
    %45 = vector.extract_strided_slice %38 {offsets = [0, 96], sizes = [16, 32], strides = [1, 1]} : vector<16x128xf32> to vector<16x32xf32>
    %46 = math.tanh %45 : vector<16x32xf32>
    %47 = vector.extract_strided_slice %44 {offsets = [0, 32], sizes = [16, 32], strides = [1, 1]} : vector<16x96xf32> to vector<16x32xf32>
    %48 = arith.mulf %47, %28 : vector<16x32xf32>
    %49 = vector.extract_strided_slice %44 {offsets = [0, 0], sizes = [16, 32], strides = [1, 1]} : vector<16x96xf32> to vector<16x32xf32>
    %50 = arith.mulf %49, %46 : vector<16x32xf32>
    %51 = arith.addf %48, %50 : vector<16x32xf32>
    %52 = vector.extract_strided_slice %44 {offsets = [0, 64], sizes = [16, 32], strides = [1, 1]} : vector<16x96xf32> to vector<16x32xf32>
    %53 = math.tanh %51 : vector<16x32xf32>
    %54 = arith.mulf %52, %53 : vector<16x32xf32>
    %55 = arith.truncf %54 : vector<16x32xf32> to vector<16x32xbf16>
    %c16_23 = arith.constant 16 : index
    %c0_24 = arith.constant 0 : index
    %56 = vector.load %arg11[%c16_23, %c0_24] : memref<128x32xbf16, #tpu.memory_space<vmem>>, vector<16x32xbf16>
    tpu.vector_store %arg11[%c16_23, %c0_24], %55 {strides = array<i32>} : memref<128x32xbf16, #tpu.memory_space<vmem>>, vector<16x32xbf16>,
    %c32 = arith.constant 32 : index
    %c0_25 = arith.constant 0 : index
    %57 = vector.load %arg10[%c32, %c0_25] : memref<128x128xf32, #tpu.memory_space<vmem>>, vector<16x128xf32>
    %58 = arith.truncf %54 : vector<16x32xf32> to vector<16x32xbf16>
    %c0_26 = arith.constant 0 : index
    %c0_27 = arith.constant 0 : index
    %59 = vector.load %arg3[%c0_26, %c0_27] : memref<32x128xbf16, #tpu.memory_space<vmem>>, vector<32x128xbf16>
    %cst_28 = arith.constant dense<0.000000e+00> : vector<16x128xf32>
    %60 = tpu.matmul %58, %59, %cst_28 {dimension_numbers = #tpu.dot_dimension_numbers<[1], [0], [0], [1], [0, 0, 1, 1], [], []>} : vector<16x32xbf16>, vector<32x128xbf16>, vector<16x128xf32> -> vector<16x128xf32>
    %61 = arith.addf %57, %60 : vector<16x128xf32>
    %62 = vector.extract_strided_slice %61 {offsets = [0, 0], sizes = [16, 96], strides = [1, 1]} : vector<16x128xf32> to vector<16x96xf32>
    %63 = arith.negf %62 : vector<16x96xf32>
    %64 = math.exp %63 : vector<16x96xf32>
    %cst_29 = arith.constant 1.000000e+00 : f32
    %65 = vector.broadcast %cst_29 : f32 to vector<16x96xf32>
    %66 = arith.addf %65, %64 : vector<16x96xf32>
    %67 = arith.divf %65, %66 : vector<16x96xf32>
    %68 = vector.extract_strided_slice %61 {offsets = [0, 96], sizes = [16, 32], strides = [1, 1]} : vector<16x128xf32> to vector<16x32xf32>
    %69 = math.tanh %68 : vector<16x32xf32>
    %70 = vector.extract_strided_slice %67 {offsets = [0, 32], sizes = [16, 32], strides = [1, 1]} : vector<16x96xf32> to vector<16x32xf32>
    %71 = arith.mulf %70, %51 : vector<16x32xf32>
    %72 = vector.extract_strided_slice %67 {offsets = [0, 0], sizes = [16, 32], strides = [1, 1]} : vector<16x96xf32> to vector<16x32xf32>
    %73 = arith.mulf %72, %69 : vector<16x32xf32>
    %74 = arith.addf %71, %73 : vector<16x32xf32>
    %75 = vector.extract_strided_slice %67 {offsets = [0, 64], sizes = [16, 32], strides = [1, 1]} : vector<16x96xf32> to vector<16x32xf32>
    %76 = math.tanh %74 : vector<16x32xf32>
    %77 = arith.mulf %75, %76 : vector<16x32xf32>
    %78 = arith.truncf %77 : vector<16x32xf32> to vector<16x32xbf16>
    %c32_30 = arith.constant 32 : index
    %c0_31 = arith.constant 0 : index
    %79 = vector.load %arg11[%c32_30, %c0_31] : memref<128x32xbf16, #tpu.memory_space<vmem>>, vector<16x32xbf16>
    tpu.vector_store %arg11[%c32_30, %c0_31], %78 {strides = array<i32>} : memref<128x32xbf16, #tpu.memory_space<vmem>>, vector<16x32xbf16>,
    %c48 = arith.constant 48 : index
    %c0_32 = arith.constant 0 : index
    %80 = vector.load %arg10[%c48, %c0_32] : memref<128x128xf32, #tpu.memory_space<vmem>>, vector<16x128xf32>
    %81 = arith.truncf %77 : vector<16x32xf32> to vector<16x32xbf16>
    %c0_33 = arith.constant 0 : index
    %c0_34 = arith.constant 0 : index
    %82 = vector.load %arg3[%c0_33, %c0_34] : memref<32x128xbf16, #tpu.memory_space<vmem>>, vector<32x128xbf16>
    %cst_35 = arith.constant dense<0.000000e+00> : vector<16x128xf32>
    %83 = tpu.matmul %81, %82, %cst_35 {dimension_numbers = #tpu.dot_dimension_numbers<[1], [0], [0], [1], [0, 0, 1, 1], [], []>} : vector<16x32xbf16>, vector<32x128xbf16>, vector<16x128xf32> -> vector<16x128xf32>
    %84 = arith.addf %80, %83 : vector<16x128xf32>
    %85 = vector.extract_strided_slice %84 {offsets = [0, 0], sizes = [16, 96], strides = [1, 1]} : vector<16x128xf32> to vector<16x96xf32>
    %86 = arith.negf %85 : vector<16x96xf32>
    %87 = math.exp %86 : vector<16x96xf32>
    %cst_36 = arith.constant 1.000000e+00 : f32
    %88 = vector.broadcast %cst_36 : f32 to vector<16x96xf32>
    %89 = arith.addf %88, %87 : vector<16x96xf32>
    %90 = arith.divf %88, %89 : vector<16x96xf32>
    %91 = vector.extract_strided_slice %84 {offsets = [0, 96], sizes = [16, 32], strides = [1, 1]} : vector<16x128xf32> to vector<16x32xf32>
    %92 = math.tanh %91 : vector<16x32xf32>
    %93 = vector.extract_strided_slice %90 {offsets = [0, 32], sizes = [16, 32], strides = [1, 1]} : vector<16x96xf32> to vector<16x32xf32>
    %94 = arith.mulf %93, %74 : vector<16x32xf32>
    %95 = vector.extract_strided_slice %90 {offsets = [0, 0], sizes = [16, 32], strides = [1, 1]} : vector<16x96xf32> to vector<16x32xf32>
    %96 = arith.mulf %95, %92 : vector<16x32xf32>
    %97 = arith.addf %94, %96 : vector<16x32xf32>
    %98 = vector.extract_strided_slice %90 {offsets = [0, 64], sizes = [16, 32], strides = [1, 1]} : vector<16x96xf32> to vector<16x32xf32>
    %99 = math.tanh %97 : vector<16x32xf32>
    %100 = arith.mulf %98, %99 : vector<16x32xf32>
    %101 = arith.truncf %100 : vector<16x32xf32> to vector<16x32xbf16>
    %c48_37 = arith.constant 48 : index
    %c0_38 = arith.constant 0 : index
    %102 = vector.load %arg11[%c48_37, %c0_38] : memref<128x32xbf16, #tpu.memory_space<vmem>>, vector<16x32xbf16>
    tpu.vector_store %arg11[%c48_37, %c0_38], %101 {strides = array<i32>} : memref<128x32xbf16, #tpu.memory_space<vmem>>, vector<16x32xbf16>,
    %c64 = arith.constant 64 : index
    %c0_39 = arith.constant 0 : index
    %103 = vector.load %arg10[%c64, %c0_39] : memref<128x128xf32, #tpu.memory_space<vmem>>, vector<16x128xf32>
    %104 = arith.truncf %100 : vector<16x32xf32> to vector<16x32xbf16>
    %c0_40 = arith.constant 0 : index
    %c0_41 = arith.constant 0 : index
    %105 = vector.load %arg3[%c0_40, %c0_41] : memref<32x128xbf16, #tpu.memory_space<vmem>>, vector<32x128xbf16>
    %cst_42 = arith.constant dense<0.000000e+00> : vector<16x128xf32>
    %106 = tpu.matmul %104, %105, %cst_42 {dimension_numbers = #tpu.dot_dimension_numbers<[1], [0], [0], [1], [0, 0, 1, 1], [], []>} : vector<16x32xbf16>, vector<32x128xbf16>, vector<16x128xf32> -> vector<16x128xf32>
    %107 = arith.addf %103, %106 : vector<16x128xf32>
    %108 = vector.extract_strided_slice %107 {offsets = [0, 0], sizes = [16, 96], strides = [1, 1]} : vector<16x128xf32> to vector<16x96xf32>
    %109 = arith.negf %108 : vector<16x96xf32>
    %110 = math.exp %109 : vector<16x96xf32>
    %cst_43 = arith.constant 1.000000e+00 : f32
    %111 = vector.broadcast %cst_43 : f32 to vector<16x96xf32>
    %112 = arith.addf %111, %110 : vector<16x96xf32>
    %113 = arith.divf %111, %112 : vector<16x96xf32>
    %114 = vector.extract_strided_slice %107 {offsets = [0, 96], sizes = [16, 32], strides = [1, 1]} : vector<16x128xf32> to vector<16x32xf32>
    %115 = math.tanh %114 : vector<16x32xf32>
    %116 = vector.extract_strided_slice %113 {offsets = [0, 32], sizes = [16, 32], strides = [1, 1]} : vector<16x96xf32> to vector<16x32xf32>
    %117 = arith.mulf %116, %97 : vector<16x32xf32>
    %118 = vector.extract_strided_slice %113 {offsets = [0, 0], sizes = [16, 32], strides = [1, 1]} : vector<16x96xf32> to vector<16x32xf32>
    %119 = arith.mulf %118, %115 : vector<16x32xf32>
    %120 = arith.addf %117, %119 : vector<16x32xf32>
    %121 = vector.extract_strided_slice %113 {offsets = [0, 64], sizes = [16, 32], strides = [1, 1]} : vector<16x96xf32> to vector<16x32xf32>
    %122 = math.tanh %120 : vector<16x32xf32>
    %123 = arith.mulf %121, %122 : vector<16x32xf32>
    %124 = arith.truncf %123 : vector<16x32xf32> to vector<16x32xbf16>
    %c64_44 = arith.constant 64 : index
    %c0_45 = arith.constant 0 : index
    %125 = vector.load %arg11[%c64_44, %c0_45] : memref<128x32xbf16, #tpu.memory_space<vmem>>, vector<16x32xbf16>
    tpu.vector_store %arg11[%c64_44, %c0_45], %124 {strides = array<i32>} : memref<128x32xbf16, #tpu.memory_space<vmem>>, vector<16x32xbf16>,
    %c80 = arith.constant 80 : index
    %c0_46 = arith.constant 0 : index
    %126 = vector.load %arg10[%c80, %c0_46] : memref<128x128xf32, #tpu.memory_space<vmem>>, vector<16x128xf32>
    %127 = arith.truncf %123 : vector<16x32xf32> to vector<16x32xbf16>
    %c0_47 = arith.constant 0 : index
    %c0_48 = arith.constant 0 : index
    %128 = vector.load %arg3[%c0_47, %c0_48] : memref<32x128xbf16, #tpu.memory_space<vmem>>, vector<32x128xbf16>
    %cst_49 = arith.constant dense<0.000000e+00> : vector<16x128xf32>
    %129 = tpu.matmul %127, %128, %cst_49 {dimension_numbers = #tpu.dot_dimension_numbers<[1], [0], [0], [1], [0, 0, 1, 1], [], []>} : vector<16x32xbf16>, vector<32x128xbf16>, vector<16x128xf32> -> vector<16x128xf32>
    %130 = arith.addf %126, %129 : vector<16x128xf32>
    %131 = vector.extract_strided_slice %130 {offsets = [0, 0], sizes = [16, 96], strides = [1, 1]} : vector<16x128xf32> to vector<16x96xf32>
    %132 = arith.negf %131 : vector<16x96xf32>
    %133 = math.exp %132 : vector<16x96xf32>
    %cst_50 = arith.constant 1.000000e+00 : f32
    %134 = vector.broadcast %cst_50 : f32 to vector<16x96xf32>
    %135 = arith.addf %134, %133 : vector<16x96xf32>
    %136 = arith.divf %134, %135 : vector<16x96xf32>
    %137 = vector.extract_strided_slice %130 {offsets = [0, 96], sizes = [16, 32], strides = [1, 1]} : vector<16x128xf32> to vector<16x32xf32>
    %138 = math.tanh %137 : vector<16x32xf32>
    %139 = vector.extract_strided_slice %136 {offsets = [0, 32], sizes = [16, 32], strides = [1, 1]} : vector<16x96xf32> to vector<16x32xf32>
    %140 = arith.mulf %139, %120 : vector<16x32xf32>
    %141 = vector.extract_strided_slice %136 {offsets = [0, 0], sizes = [16, 32], strides = [1, 1]} : vector<16x96xf32> to vector<16x32xf32>
    %142 = arith.mulf %141, %138 : vector<16x32xf32>
    %143 = arith.addf %140, %142 : vector<16x32xf32>
    %144 = vector.extract_strided_slice %136 {offsets = [0, 64], sizes = [16, 32], strides = [1, 1]} : vector<16x96xf32> to vector<16x32xf32>
    %145 = math.tanh %143 : vector<16x32xf32>
    %146 = arith.mulf %144, %145 : vector<16x32xf32>
    %147 = arith.truncf %146 : vector<16x32xf32> to vector<16x32xbf16>
    %c80_51 = arith.constant 80 : index
    %c0_52 = arith.constant 0 : index
    %148 = vector.load %arg11[%c80_51, %c0_52] : memref<128x32xbf16, #tpu.memory_space<vmem>>, vector<16x32xbf16>
    tpu.vector_store %arg11[%c80_51, %c0_52], %147 {strides = array<i32>} : memref<128x32xbf16, #tpu.memory_space<vmem>>, vector<16x32xbf16>,
    %c96 = arith.constant 96 : index
    %c0_53 = arith.constant 0 : index
    %149 = vector.load %arg10[%c96, %c0_53] : memref<128x128xf32, #tpu.memory_space<vmem>>, vector<16x128xf32>
    %150 = arith.truncf %146 : vector<16x32xf32> to vector<16x32xbf16>
    %c0_54 = arith.constant 0 : index
    %c0_55 = arith.constant 0 : index
    %151 = vector.load %arg3[%c0_54, %c0_55] : memref<32x128xbf16, #tpu.memory_space<vmem>>, vector<32x128xbf16>
    %cst_56 = arith.constant dense<0.000000e+00> : vector<16x128xf32>
    %152 = tpu.matmul %150, %151, %cst_56 {dimension_numbers = #tpu.dot_dimension_numbers<[1], [0], [0], [1], [0, 0, 1, 1], [], []>} : vector<16x32xbf16>, vector<32x128xbf16>, vector<16x128xf32> -> vector<16x128xf32>
    %153 = arith.addf %149, %152 : vector<16x128xf32>
    %154 = vector.extract_strided_slice %153 {offsets = [0, 0], sizes = [16, 96], strides = [1, 1]} : vector<16x128xf32> to vector<16x96xf32>
    %155 = arith.negf %154 : vector<16x96xf32>
    %156 = math.exp %155 : vector<16x96xf32>
    %cst_57 = arith.constant 1.000000e+00 : f32
    %157 = vector.broadcast %cst_57 : f32 to vector<16x96xf32>
    %158 = arith.addf %157, %156 : vector<16x96xf32>
    %159 = arith.divf %157, %158 : vector<16x96xf32>
    %160 = vector.extract_strided_slice %153 {offsets = [0, 96], sizes = [16, 32], strides = [1, 1]} : vector<16x128xf32> to vector<16x32xf32>
    %161 = math.tanh %160 : vector<16x32xf32>
    %162 = vector.extract_strided_slice %159 {offsets = [0, 32], sizes = [16, 32], strides = [1, 1]} : vector<16x96xf32> to vector<16x32xf32>
    %163 = arith.mulf %162, %143 : vector<16x32xf32>
    %164 = vector.extract_strided_slice %159 {offsets = [0, 0], sizes = [16, 32], strides = [1, 1]} : vector<16x96xf32> to vector<16x32xf32>
    %165 = arith.mulf %164, %161 : vector<16x32xf32>
    %166 = arith.addf %163, %165 : vector<16x32xf32>
    %167 = vector.extract_strided_slice %159 {offsets = [0, 64], sizes = [16, 32], strides = [1, 1]} : vector<16x96xf32> to vector<16x32xf32>
    %168 = math.tanh %166 : vector<16x32xf32>
    %169 = arith.mulf %167, %168 : vector<16x32xf32>
    %170 = arith.truncf %169 : vector<16x32xf32> to vector<16x32xbf16>
    %c96_58 = arith.constant 96 : index
    %c0_59 = arith.constant 0 : index
    %171 = vector.load %arg11[%c96_58, %c0_59] : memref<128x32xbf16, #tpu.memory_space<vmem>>, vector<16x32xbf16>
    tpu.vector_store %arg11[%c96_58, %c0_59], %170 {strides = array<i32>} : memref<128x32xbf16, #tpu.memory_space<vmem>>, vector<16x32xbf16>,
    %c112 = arith.constant 112 : index
    %c0_60 = arith.constant 0 : index
    %172 = vector.load %arg10[%c112, %c0_60] : memref<128x128xf32, #tpu.memory_space<vmem>>, vector<16x128xf32>
    %173 = arith.truncf %169 : vector<16x32xf32> to vector<16x32xbf16>
    %c0_61 = arith.constant 0 : index
    %c0_62 = arith.constant 0 : index
    %174 = vector.load %arg3[%c0_61, %c0_62] : memref<32x128xbf16, #tpu.memory_space<vmem>>, vector<32x128xbf16>
    %cst_63 = arith.constant dense<0.000000e+00> : vector<16x128xf32>
    %175 = tpu.matmul %173, %174, %cst_63 {dimension_numbers = #tpu.dot_dimension_numbers<[1], [0], [0], [1], [0, 0, 1, 1], [], []>} : vector<16x32xbf16>, vector<32x128xbf16>, vector<16x128xf32> -> vector<16x128xf32>
    %176 = arith.addf %172, %175 : vector<16x128xf32>
    %177 = vector.extract_strided_slice %176 {offsets = [0, 0], sizes = [16, 96], strides = [1, 1]} : vector<16x128xf32> to vector<16x96xf32>
    %178 = arith.negf %177 : vector<16x96xf32>
    %179 = math.exp %178 : vector<16x96xf32>
    %cst_64 = arith.constant 1.000000e+00 : f32
    %180 = vector.broadcast %cst_64 : f32 to vector<16x96xf32>
    %181 = arith.addf %180, %179 : vector<16x96xf32>
    %182 = arith.divf %180, %181 : vector<16x96xf32>
    %183 = vector.extract_strided_slice %176 {offsets = [0, 96], sizes = [16, 32], strides = [1, 1]} : vector<16x128xf32> to vector<16x32xf32>
    %184 = math.tanh %183 : vector<16x32xf32>
    %185 = vector.extract_strided_slice %182 {offsets = [0, 32], sizes = [16, 32], strides = [1, 1]} : vector<16x96xf32> to vector<16x32xf32>
    %186 = arith.mulf %185, %166 : vector<16x32xf32>
    %187 = vector.extract_strided_slice %182 {offsets = [0, 0], sizes = [16, 32], strides = [1, 1]} : vector<16x96xf32> to vector<16x32xf32>
    %188 = arith.mulf %187, %184 : vector<16x32xf32>
    %189 = arith.addf %186, %188 : vector<16x32xf32>
    %190 = vector.extract_strided_slice %182 {offsets = [0, 64], sizes = [16, 32], strides = [1, 1]} : vector<16x96xf32> to vector<16x32xf32>
    %191 = math.tanh %189 : vector<16x32xf32>
    %192 = arith.mulf %190, %191 : vector<16x32xf32>
    %193 = arith.truncf %192 : vector<16x32xf32> to vector<16x32xbf16>
    %c112_65 = arith.constant 112 : index
    %c0_66 = arith.constant 0 : index
    %194 = vector.load %arg11[%c112_65, %c0_66] : memref<128x32xbf16, #tpu.memory_space<vmem>>, vector<16x32xbf16>
    tpu.vector_store %arg11[%c112_65, %c0_66], %193 {strides = array<i32>} : memref<128x32xbf16, #tpu.memory_space<vmem>>, vector<16x32xbf16>,
    %c0_67 = arith.constant 0 : index
    %c0_68 = arith.constant 0 : index
    %195 = vector.load %arg11[%c0_67, %c0_68] : memref<128x32xbf16, #tpu.memory_space<vmem>>, vector<128x32xbf16>
    %c0_69 = arith.constant 0 : index
    %c0_70 = arith.constant 0 : index
    %196 = vector.load %arg5[%c0_69, %c0_70] : memref<32x16xbf16, #tpu.memory_space<vmem>>, vector<32x16xbf16>
    %cst_71 = arith.constant dense<0.000000e+00> : vector<128x16xf32>
    %197 = tpu.matmul %195, %196, %cst_71 {dimension_numbers = #tpu.dot_dimension_numbers<[1], [0], [0], [1], [0, 0, 1, 1], [], []>} : vector<128x32xbf16>, vector<32x16xbf16>, vector<128x16xf32> -> vector<128x16xf32>
    %c0_72 = arith.constant 0 : index
    %c0_73 = arith.constant 0 : index
    %198 = vector.load %arg6[%c0_72, %c0_73] : memref<1x16xf32, #tpu.memory_space<vmem>>, vector<1x16xf32>
    %199 = vector.broadcast %198 : vector<1x16xf32> to vector<128x16xf32>
    %200 = arith.addf %197, %199 : vector<128x16xf32>
    %201 = vector.shape_cast %200 : vector<128x16xf32> to vector<8x16x16xf32>
    %202 = vector.extract_strided_slice %201 {offsets = [0, 0, 0], sizes = [8, 8, 16], strides = [1, 1, 1]} : vector<8x16x16xf32> to vector<8x8x16xf32>
    %203 = vector.shape_cast %202 : vector<8x8x16xf32> to vector<1x8x8x16xf32>
    %cst_74 = arith.constant dense<0.000000e+00> : vector<1xf32>
    %204 = vector.multi_reduction <add>, %203, %cst_74 [1, 2, 3] : vector<1x8x8x16xf32> to vector<1xf32>
    %205 = vector.shape_cast %204 : vector<1xf32> to vector<1x1x1x1xf32>
    %206 = vector.extract %205[0, 0, 0, 0] : f32 from vector<1x1x1x1xf32>
    %cst_75 = arith.constant 9.765625E-4 : f32
    %207 = arith.mulf %206, %cst_75 : f32
    %208 = vector.broadcast %207 : f32 to vector<8x8x16xf32>
    %209 = arith.subf %202, %208 : vector<8x8x16xf32>
    %210 = arith.mulf %209, %209 : vector<8x8x16xf32>
    %211 = vector.shape_cast %210 : vector<8x8x16xf32> to vector<1x8x8x16xf32>
    %cst_76 = arith.constant dense<0.000000e+00> : vector<1xf32>
    %212 = vector.multi_reduction <add>, %211, %cst_76 [1, 2, 3] : vector<1x8x8x16xf32> to vector<1xf32>
    %213 = vector.shape_cast %212 : vector<1xf32> to vector<1x1x1x1xf32>
    %214 = vector.extract %213[0, 0, 0, 0] : f32 from vector<1x1x1x1xf32>
    %cst_77 = arith.constant 9.765625E-4 : f32
    %215 = arith.mulf %214, %cst_77 : f32
    %cst_78 = arith.constant 9.99999993E-9 : f32
    %216 = arith.addf %215, %cst_78 : f32
    %217 = math.rsqrt %216 : f32
    %218 = vector.broadcast %217 : f32 to vector<8x8x16xf32>
    %219 = arith.mulf %209, %218 : vector<8x8x16xf32>
    %c0_79 = arith.constant 0 : index
    %c0_80 = arith.constant 0 : index
    %220 = vector.load %arg7[%c0_79, %c0_80] : memref<1x16xf32, #tpu.memory_space<vmem>>, vector<1x16xf32>
    %221 = vector.shape_cast %220 : vector<1x16xf32> to vector<1x1x16xf32>
    %222 = vector.broadcast %221 : vector<1x1x16xf32> to vector<8x8x16xf32>
    %223 = arith.mulf %219, %222 : vector<8x8x16xf32>
    %c0_81 = arith.constant 0 : index
    %c0_82 = arith.constant 0 : index
    %224 = vector.load %arg8[%c0_81, %c0_82] : memref<1x16xf32, #tpu.memory_space<vmem>>, vector<1x16xf32>
    %225 = vector.shape_cast %224 : vector<1x16xf32> to vector<1x1x16xf32>
    %226 = vector.broadcast %225 : vector<1x1x16xf32> to vector<8x8x16xf32>
    %227 = arith.addf %223, %226 : vector<8x8x16xf32>
    %c0_83 = arith.constant 0 : index
    %c0_84 = arith.constant 0 : index
    %c0_85 = arith.constant 0 : index
    %228 = vector.load %arg1[%c0_83, %c0_84, %c0_85] : memref<8x16x16xf32, #tpu.memory_space<vmem>>, vector<8x8x16xf32>
    %229 = arith.addf %227, %228 : vector<8x8x16xf32>
    %c0_86 = arith.constant 0 : index
    %c0_87 = arith.constant 0 : index
    %c0_88 = arith.constant 0 : index
    %230 = vector.load %arg9[%c0_86, %c0_87, %c0_88] : memref<8x16x16xf32, #tpu.memory_space<vmem>>, vector<8x8x16xf32>
    tpu.vector_store %arg9[%c0_86, %c0_87, %c0_88], %229 {strides = array<i32>} : memref<8x16x16xf32, #tpu.memory_space<vmem>>, vector<8x8x16xf32>,
    %231 = vector.extract_strided_slice %201 {offsets = [0, 8, 0], sizes = [8, 8, 16], strides = [1, 1, 1]} : vector<8x16x16xf32> to vector<8x8x16xf32>
    %232 = vector.shape_cast %231 : vector<8x8x16xf32> to vector<1x8x8x16xf32>
    %cst_89 = arith.constant dense<0.000000e+00> : vector<1xf32>
    %233 = vector.multi_reduction <add>, %232, %cst_89 [1, 2, 3] : vector<1x8x8x16xf32> to vector<1xf32>
    %234 = vector.shape_cast %233 : vector<1xf32> to vector<1x1x1x1xf32>
    %235 = vector.extract %234[0, 0, 0, 0] : f32 from vector<1x1x1x1xf32>
    %cst_90 = arith.constant 9.765625E-4 : f32
    %236 = arith.mulf %235, %cst_90 : f32
    %237 = vector.broadcast %236 : f32 to vector<8x8x16xf32>
    %238 = arith.subf %231, %237 : vector<8x8x16xf32>
    %239 = arith.mulf %238, %238 : vector<8x8x16xf32>
    %240 = vector.shape_cast %239 : vector<8x8x16xf32> to vector<1x8x8x16xf32>
    %cst_91 = arith.constant dense<0.000000e+00> : vector<1xf32>
    %241 = vector.multi_reduction <add>, %240, %cst_91 [1, 2, 3] : vector<1x8x8x16xf32> to vector<1xf32>
    %242 = vector.shape_cast %241 : vector<1xf32> to vector<1x1x1x1xf32>
    %243 = vector.extract %242[0, 0, 0, 0] : f32 from vector<1x1x1x1xf32>
    %cst_92 = arith.constant 9.765625E-4 : f32
    %244 = arith.mulf %243, %cst_92 : f32
    %cst_93 = arith.constant 9.99999993E-9 : f32
    %245 = arith.addf %244, %cst_93 : f32
    %246 = math.rsqrt %245 : f32
    %247 = vector.broadcast %246 : f32 to vector<8x8x16xf32>
    %248 = arith.mulf %238, %247 : vector<8x8x16xf32>
    %c0_94 = arith.constant 0 : index
    %c0_95 = arith.constant 0 : index
    %249 = vector.load %arg7[%c0_94, %c0_95] : memref<1x16xf32, #tpu.memory_space<vmem>>, vector<1x16xf32>
    %250 = vector.shape_cast %249 : vector<1x16xf32> to vector<1x1x16xf32>
    %251 = vector.broadcast %250 : vector<1x1x16xf32> to vector<8x8x16xf32>
    %252 = arith.mulf %248, %251 : vector<8x8x16xf32>
    %c0_96 = arith.constant 0 : index
    %c0_97 = arith.constant 0 : index
    %253 = vector.load %arg8[%c0_96, %c0_97] : memref<1x16xf32, #tpu.memory_space<vmem>>, vector<1x16xf32>
    %254 = vector.shape_cast %253 : vector<1x16xf32> to vector<1x1x16xf32>
    %255 = vector.broadcast %254 : vector<1x1x16xf32> to vector<8x8x16xf32>
    %256 = arith.addf %252, %255 : vector<8x8x16xf32>
    %c0_98 = arith.constant 0 : index
    %c8 = arith.constant 8 : index
    %c0_99 = arith.constant 0 : index
    %257 = vector.load %arg1[%c0_98, %c8, %c0_99] : memref<8x16x16xf32, #tpu.memory_space<vmem>>, vector<8x8x16xf32>
    %258 = arith.addf %256, %257 : vector<8x8x16xf32>
    %c0_100 = arith.constant 0 : index
    %c8_101 = arith.constant 8 : index
    %c0_102 = arith.constant 0 : index
    %259 = vector.load %arg9[%c0_100, %c8_101, %c0_102] : memref<8x16x16xf32, #tpu.memory_space<vmem>>, vector<8x8x16xf32>
    tpu.vector_store %arg9[%c0_100, %c8_101, %c0_102], %258 {strides = array<i32>} : memref<8x16x16xf32, #tpu.memory_space<vmem>>, vector<8x8x16xf32>,
    return
  }
  func.func @transform_0(%arg0: i32) -> (i32, i32, i32) {
    %c0_i32 = arith.constant 0 : i32
    %c0_i32_0 = arith.constant 0 : i32
    %c0_i32_1 = arith.constant 0 : i32
    %c0_i32_2 = arith.constant 0 : i32
    return %c0_i32, %c0_i32_0, %c0_i32_1 : i32, i32, i32
  }
  func.func @transform_1(%arg0: i32) -> (i32, i32) {
    %c0_i32 = arith.constant 0 : i32
    %c0_i32_0 = arith.constant 0 : i32
    %c0_i32_1 = arith.constant 0 : i32
    return %c0_i32, %c0_i32_0 : i32, i32
  }
  func.func @transform_2(%arg0: i32) -> (i32, i32) {
    %c0_i32 = arith.constant 0 : i32
    %c0_i32_0 = arith.constant 0 : i32
    %c0_i32_1 = arith.constant 0 : i32
    return %c0_i32, %c0_i32_0 : i32, i32
  }
  func.func @transform_3(%arg0: i32) -> (i32, i32) {
    %c0_i32 = arith.constant 0 : i32
    %c0_i32_0 = arith.constant 0 : i32
    %c0_i32_1 = arith.constant 0 : i32
    return %c0_i32, %c0_i32_0 : i32, i32
  }
  func.func @transform_4(%arg0: i32) -> (i32, i32) {
    %c0_i32 = arith.constant 0 : i32
    %c0_i32_0 = arith.constant 0 : i32
    %c0_i32_1 = arith.constant 0 : i32
    return %c0_i32, %c0_i32_0 : i32, i32
  }
  func.func @transform_5(%arg0: i32) -> (i32, i32) {
    %c0_i32 = arith.constant 0 : i32
    %c0_i32_0 = arith.constant 0 : i32
    %c0_i32_1 = arith.constant 0 : i32
    return %c0_i32, %c0_i32_0 : i32, i32
  }
  func.func @transform_6(%arg0: i32) -> (i32, i32) {
    %c0_i32 = arith.constant 0 : i32
    %c0_i32_0 = arith.constant 0 : i32
    %c0_i32_1 = arith.constant 0 : i32
    return %c0_i32, %c0_i32_0 : i32, i32
  }
  func.func @transform_7(%arg0: i32) -> (i32, i32) {
    %c0_i32 = arith.constant 0 : i32
    %c0_i32_0 = arith.constant 0 : i32
    %c0_i32_1 = arith.constant 0 : i32
    return %c0_i32, %c0_i32_0 : i32, i32
  }
  func.func @transform_8(%arg0: i32) -> (i32, i32, i32) {
    %c0_i32 = arith.constant 0 : i32
    %c0_i32_0 = arith.constant 0 : i32
    %c0_i32_1 = arith.constant 0 : i32
    %c0_i32_2 = arith.constant 0 : i32
    return %c0_i32, %c0_i32_0, %c0_i32_1 : i32, i32, i32
  }
}

</mosaic_0001>

<llo_original>
// kernel: dual_rnn_block_pallas.2
$region0: #{dual_rnn_block_pallas.2}
  #allocation0 [shape = 'u32[]', space=smem, size = 0x4, offset = 0x4, fixed_abs, tag = 'smem constant byte address 0x4 - core index']
  #allocation1 [shape = 'u32[144,128]{1,0:T(1,128)}', space=vmem, size = 0x12000, scoped, tag = 'internal scratch']
  #allocation2 [shape = 'f32[128,128]{1,0:T(8,128)}', space=vmem, size = 0x10000, scoped, tag = 'scratch operand']
  #allocation3 [shape = 'bf16[128,32]{1,0:T(16,128)(2,1)}', space=vmem, size = 0x8000, scoped, tag = 'scratch operand']
  %s0 = inlined_call_operand.hbm [shape: f32[8,16,16], index: 0, kind: input, shape index: {}]
  %s1 = inlined_call_operand.hbm [shape: bf16[16,128], index: 1, kind: input, shape index: {}]
  %s2 = inlined_call_operand.hbm [shape: bf16[32,128], index: 2, kind: input, shape index: {}]
  %s3 = inlined_call_operand.hbm [shape: f32[1,128], index: 3, kind: input, shape index: {}]
  %s4 = inlined_call_operand.hbm [shape: bf16[32,16], index: 4, kind: input, shape index: {}]
  %s5 = inlined_call_operand.hbm [shape: f32[1,16], index: 5, kind: input, shape index: {}]
  %s6 = inlined_call_operand.hbm [shape: f32[1,16], index: 6, kind: input, shape index: {}]
  %s7 = inlined_call_operand.hbm [shape: f32[1,16], index: 7, kind: input, shape index: {}]
  %s8 = inlined_call_operand.hbm [shape: f32[8,16,16], index: 8, kind: output, shape index: {}]
  %s9 = sld [smem:[#allocation0]]
  $region74: #{dual_rnn_block_pallas.2} parent=0
    _
  %s11 = ssub.s32 1, %s9
  %s12 = scalar_select 0, %s11, %s9
  $region1: #{dual_rnn_block_pallas.2} parent=0
    #allocation4 [shape = 'u8[65536]{0}', space=vmem, size = 0x10000, scoped, tag = 'input window, operand 0, single buffered']
    #allocation5 [shape = 's32[1]{0}', space=sflag, size = 0x4, scoped, tag = 'scoped memory for dual_rnn_block_pallas.2']
    #allocation6 [shape = 's32[1]{0}', space=sflag, size = 0x4, scoped, tag = 'scoped memory for dual_rnn_block_pallas.2']
    #allocation7 [shape = 'u8[4096]{0}', space=vmem, size = 0x1000, scoped, tag = 'input window, operand 1, single buffered']
    #allocation8 [shape = 's32[1]{0}', space=sflag, size = 0x4, scoped, tag = 'scoped memory for dual_rnn_block_pallas.2']
    #allocation9 [shape = 'u8[8192]{0}', space=vmem, size = 0x2000, scoped, tag = 'input window, operand 2, single buffered']
    #allocation10 [shape = 'u8[512]{0}', space=vmem, size = 0x400, scoped, tag = 'input window, operand 3, single buffered']
    #allocation11 [shape = 's32[1]{0}', space=sflag, size = 0x4, scoped, tag = 'scoped memory for dual_rnn_block_pallas.2']
    #allocation12 [shape = 'u8[8192]{0}', space=vmem, size = 0x2000, scoped, tag = 'input window, operand 4, single buffered']
    #allocation13 [shape = 'u8[512]{0}', space=vmem, size = 0x400, scoped, tag = 'input window, operand 5, single buffered']
    #allocation14 [shape = 's32[1]{0}', space=sflag, size = 0x4, scoped, tag = 'scoped memory for dual_rnn_block_pallas.2']
    #allocation15 [shape = 'u8[512]{0}', space=vmem, size = 0x400, scoped, tag = 'input window, operand 6, single buffered']
    #allocation16 [shape = 'u8[512]{0}', space=vmem, size = 0x400, scoped, tag = 'input window, operand 7, single buffered']
    #allocation17 [shape = 's32[1]{0}', space=sflag, size = 0x4, scoped, tag = 'scoped memory for dual_rnn_block_pallas.2']
    #allocation18 [shape = 'u8[65536]{0}', space=vmem, size = 0x10000, scoped, tag = 'output window, operand 0, single buffered']
    %13 = vsyncpa [#allocation5], 0
    %14 = vsyncpa [#allocation8], 0
    %15 = vsyncpa [#allocation11], 0
    %16 = vsyncpa [#allocation14], 0
    %17 = vsyncpa [#allocation17], 0
    %18 = vsyncpa [#allocation6], 0
    // Predicated region
    $region2: #{dual_rnn_block_pallas.2} parent=1 // pred_check
      _
    $region3: #{dual_rnn_block_pallas.2} parent=1 // pred_check_branch
      %20 = sbr.rel (0) target = $region5
    $region4: #{dual_rnn_block_pallas.2} parent=1 // pred_region
      %s22 = ssub.s32 2048, 2048
      %23 = vsyncadd [#allocation5], %s22
      %s24 = sshll.u32 [#allocation4], 4
      %s25 = int_to_ptr.vmem [resolvable:$true] %s24
      %30 = dma.hbm_to_vmem [thread:$0]  %s0, 2048, %s25, [#allocation5], 128, 128, 8
    $region5: #{dual_rnn_block_pallas.2} parent=1 // pred_fallthru
      _
    // Predicated region
    $region6: #{dual_rnn_block_pallas.2} parent=1 // pred_check
      _
    $region7: #{dual_rnn_block_pallas.2} parent=1 // pred_check_branch
      %32 = sbr.rel (0) target = $region9
    $region8: #{dual_rnn_block_pallas.2} parent=1 // pred_region
      %s34 = ssub.s32 128, 128
      %35 = vsyncadd [#allocation8], %s34
      %s36 = sshll.u32 [#allocation7], 4
      %s37 = int_to_ptr.vmem [resolvable:$true] %s36
      %42 = dma.hbm_to_vmem [thread:$0]  %s1, 128, %s37, [#allocation8], 64, 64, 4
    $region9: #{dual_rnn_block_pallas.2} parent=1 // pred_fallthru
      _
    // Predicated region
    $region10: #{dual_rnn_block_pallas.2} parent=1 // pred_check
      _
    $region11: #{dual_rnn_block_pallas.2} parent=1 // pred_check_branch
      %44 = sbr.rel (0) target = $region13
    $region12: #{dual_rnn_block_pallas.2} parent=1 // pred_region
      %s46 = ssub.s32 256, 256
      %47 = vsyncadd [#allocation8], %s46
      %s48 = sshll.u32 [#allocation9], 4
      %s49 = int_to_ptr.vmem [resolvable:$true] %s48
      %54 = dma.hbm_to_vmem [thread:$0]  %s2, 256, %s49, [#allocation8], 64, 64, 4
    $region13: #{dual_rnn_block_pallas.2} parent=1 // pred_fallthru
      _
    // Predicated region
    $region14: #{dual_rnn_block_pallas.2} parent=1 // pred_check
      _
    $region15: #{dual_rnn_block_pallas.2} parent=1 // pred_check_branch
      %56 = sbr.rel (0) target = $region17
    $region16: #{dual_rnn_block_pallas.2} parent=1 // pred_region
      %s58 = ssub.s32 16, 16
      %59 = vsyncadd [#allocation11], %s58
      %s61 = sshll.u32 [#allocation10], 4
      %s62 = int_to_ptr.vmem [resolvable:$true] %s61
      %64 = dma.hbm_to_vmem [thread:$0]  %s3, 16, %s62, [#allocation11]
    $region17: #{dual_rnn_block_pallas.2} parent=1 // pred_fallthru
      _
    // Predicated region
    $region18: #{dual_rnn_block_pallas.2} parent=1 // pred_check
      _
    $region19: #{dual_rnn_block_pallas.2} parent=1 // pred_check_branch
      %66 = sbr.rel (0) target = $region21
    $region20: #{dual_rnn_block_pallas.2} parent=1 // pred_region
      %s68 = ssub.s32 256, 256
      %69 = vsyncadd [#allocation11], %s68
      %s70 = sshll.u32 [#allocation12], 4
      %s71 = int_to_ptr.vmem [resolvable:$true] %s70
      %76 = dma.hbm_to_vmem [thread:$0]  %s4, 256, %s71, [#allocation11], 64, 64, 4
    $region21: #{dual_rnn_block_pallas.2} parent=1 // pred_fallthru
      _
    // Predicated region
    $region22: #{dual_rnn_block_pallas.2} parent=1 // pred_check
      _
    $region23: #{dual_rnn_block_pallas.2} parent=1 // pred_check_branch
      %78 = sbr.rel (0) target = $region25
    $region24: #{dual_rnn_block_pallas.2} parent=1 // pred_region
      %s80 = ssub.s32 16, 16
      %81 = vsyncadd [#allocation14], %s80
      %s83 = sshll.u32 [#allocation13], 4
      %s84 = int_to_ptr.vmem [resolvable:$true] %s83
      %86 = dma.hbm_to_vmem [thread:$0]  %s5, 16, %s84, [#allocation14]
    $region25: #{dual_rnn_block_pallas.2} parent=1 // pred_fallthru
      _
    // Predicated region
    $region26: #{dual_rnn_block_pallas.2} parent=1 // pred_check
      _
    $region27: #{dual_rnn_block_pallas.2} parent=1 // pred_check_branch
      %88 = sbr.rel (0) target = $region29
    $region28: #{dual_rnn_block_pallas.2} parent=1 // pred_region
      %s90 = ssub.s32 16, 16
      %91 = vsyncadd [#allocation14], %s90
      %s93 = sshll.u32 [#allocation15], 4
      %s94 = int_to_ptr.vmem [resolvable:$true] %s93
      %96 = dma.hbm_to_vmem [thread:$0]  %s6, 16, %s94, [#allocation14]
    $region29: #{dual_rnn_block_pallas.2} parent=1 // pred_fallthru
      _
    // Predicated region
    $region30: #{dual_rnn_block_pallas.2} parent=1 // pred_check
      _
    $region31: #{dual_rnn_block_pallas.2} parent=1 // pred_check_branch
      %98 = sbr.rel (0) target = $region33
    $region32: #{dual_rnn_block_pallas.2} parent=1 // pred_region
      %s100 = ssub.s32 16, 16
      %101 = vsyncadd [#allocation17], %s100
      %s103 = sshll.u32 [#allocation16], 4
      %s104 = int_to_ptr.vmem [resolvable:$true] %s103
      %106 = dma.hbm_to_vmem [thread:$0]  %s7, 16, %s104, [#allocation17]
    $region33: #{dual_rnn_block_pallas.2} parent=1 // pred_fallthru
      _
    // Predicated region
    $region34: #{dual_rnn_block_pallas.2} parent=1 // pred_check
      _
    $region35: #{dual_rnn_block_pallas.2} parent=1 // pred_check_branch
      %108 = sbr.rel (0) target = $region37
    $region36: #{dual_rnn_block_pallas.2} parent=1 // pred_region
      %109 = dma.done [#allocation5], 2048
    $region37: #{dual_rnn_block_pallas.2} parent=1 // pred_fallthru
      _
    // Predicated region
    $region38: #{dual_rnn_block_pallas.2} parent=1 // pred_check
      _
    $region39: #{dual_rnn_block_pallas.2} parent=1 // pred_check_branch
      %111 = sbr.rel (0) target = $region41
    $region40: #{dual_rnn_block_pallas.2} parent=1 // pred_region
      %112 = dma.done [#allocation8], 128
    $region41: #{dual_rnn_block_pallas.2} parent=1 // pred_fallthru
      _
    // Predicated region
    $region42: #{dual_rnn_block_pallas.2} parent=1 // pred_check
      _
    $region43: #{dual_rnn_block_pallas.2} parent=1 // pred_check_branch
      %114 = sbr.rel (0) target = $region45
    $region44: #{dual_rnn_block_pallas.2} parent=1 // pred_region
      %115 = dma.done [#allocation8], 256
    $region45: #{dual_rnn_block_pallas.2} parent=1 // pred_fallthru
      _
    // Predicated region
    $region46: #{dual_rnn_block_pallas.2} parent=1 // pred_check
      _
    $region47: #{dual_rnn_block_pallas.2} parent=1 // pred_check_branch
      %117 = sbr.rel (0) target = $region49
    $region48: #{dual_rnn_block_pallas.2} parent=1 // pred_region
      %118 = dma.done [#allocation11], 16
    $region49: #{dual_rnn_block_pallas.2} parent=1 // pred_fallthru
      _
    // Predicated region
    $region50: #{dual_rnn_block_pallas.2} parent=1 // pred_check
      _
    $region51: #{dual_rnn_block_pallas.2} parent=1 // pred_check_branch
      %120 = sbr.rel (0) target = $region53
    $region52: #{dual_rnn_block_pallas.2} parent=1 // pred_region
      %121 = dma.done [#allocation11], 256
    $region53: #{dual_rnn_block_pallas.2} parent=1 // pred_fallthru
      _
    // Predicated region
    $region54: #{dual_rnn_block_pallas.2} parent=1 // pred_check
      _
    $region55: #{dual_rnn_block_pallas.2} parent=1 // pred_check_branch
      %123 = sbr.rel (0) target = $region57
    $region56: #{dual_rnn_block_pallas.2} parent=1 // pred_region
      %124 = dma.done [#allocation14], 16
    $region57: #{dual_rnn_block_pallas.2} parent=1 // pred_fallthru
      _
    // Predicated region
    $region58: #{dual_rnn_block_pallas.2} parent=1 // pred_check
      _
    $region59: #{dual_rnn_block_pallas.2} parent=1 // pred_check_branch
      %126 = sbr.rel (0) target = $region61
    $region60: #{dual_rnn_block_pallas.2} parent=1 // pred_region
      %127 = dma.done [#allocation14], 16
    $region61: #{dual_rnn_block_pallas.2} parent=1 // pred_fallthru
      _
    // Predicated region
    $region62: #{dual_rnn_block_pallas.2} parent=1 // pred_check
      _
    $region63: #{dual_rnn_block_pallas.2} parent=1 // pred_check_branch
      %129 = sbr.rel (0) target = $region65
    $region64: #{dual_rnn_block_pallas.2} parent=1 // pred_region
      %130 = dma.done [#allocation17], 16
    $region65: #{dual_rnn_block_pallas.2} parent=1 // pred_fallthru
      _
    %v132 = vld [vmem:[#allocation4] sm:$0xff]
    %v133 = vld [vmem:[#allocation4 + $0x8] sm:$0xff]
    %v134 = vld [vmem:[#allocation4 + $0x10] sm:$0xff]
    %v135 = vld [vmem:[#allocation4 + $0x18] sm:$0xff]
    %v136 = vld [vmem:[#allocation4 + $0x20] sm:$0xff]
    %v137 = vld [vmem:[#allocation4 + $0x28] sm:$0xff]
    %v138 = vld [vmem:[#allocation4 + $0x30] sm:$0xff]
    %v139 = vld [vmem:[#allocation4 + $0x38] sm:$0xff]
    %v140 = vld [vmem:[#allocation4 + $0x40] sm:$0xff]
    %v141 = vld [vmem:[#allocation4 + $0x48] sm:$0xff]
    %v142 = vld [vmem:[#allocation4 + $0x50] sm:$0xff]
    %v143 = vld [vmem:[#allocation4 + $0x58] sm:$0xff]
    %v144 = vld [vmem:[#allocation4 + $0x60] sm:$0xff]
    %v145 = vld [vmem:[#allocation4 + $0x68] sm:$0xff]
    %v146 = vld [vmem:[#allocation4 + $0x70] sm:$0xff]
    %v147 = vld [vmem:[#allocation4 + $0x78] sm:$0xff]
    %v148 = vpack.c.bf16 %v133, %v132
    %v149 = vpack.c.bf16 %v135, %v134
    %v150 = vpack.c.bf16 %v137, %v136
    %v151 = vpack.c.bf16 %v139, %v138
    %v152 = vpack.c.bf16 %v141, %v140
    %v153 = vpack.c.bf16 %v143, %v142
    %v154 = vpack.c.bf16 %v145, %v144
    %v155 = vpack.c.bf16 %v147, %v146
    %v156 = vld [vmem:[#allocation7] sm:$0xf]
    %v157 = vld [vmem:[#allocation7 + $0x4] sm:$0xf]
    %v158 = vld [vmem:[#allocation10] sm:$0x1]
    %v160 = vlaneseq
    %v161 = vshrl.u32 %v160, 7
    %v162 = vsub.s32 0, %v161
    %v163 = vrot.slane %v158, %v162
    %v167 = vunpack.c.l.b16 %v156
    %v168 = vunpack.c.l.b16 %v157
    %v169 = vpack.c.b16 %v168, %v167
    %vm171 = vcmask 130048
    %v173 = vsel %vm171, %v148, 0
    %v176 = vsel %vm171, %v149, 0
    %v179 = vsel %vm171, %v150, 0
    %v182 = vsel %vm171, %v151, 0
    %v185 = vsel %vm171, %v152, 0
    %v188 = vsel %vm171, %v153, 0
    %v191 = vsel %vm171, %v154, 0
    %v194 = vsel %vm171, %v155, 0
    %196 = vmatprep.subr.bf16.mxu0 0
    %197 = vmatpush1.bf16.msra.mxu0 %v169
    %198 = vmatprep.subr.bf16.mxu0 0
    %199 = vmatpush1.bf16.msra.mxu0 0
    %200 = vmatprep.subr.bf16.mxu0 0
    %201 = vmatpush1.bf16.msra.mxu0 0
    %202 = vmatprep.subr.bf16.mxu0 0
    %203 = vmatpush1.bf16.msra.mxu0 0
    %204 = vmatprep.subr.bf16.mxu0 0
    %205 = vmatpush1.bf16.msra.mxu0 0
    %206 = vmatprep.subr.bf16.mxu0 0
    %207 = vmatpush1.bf16.msra.mxu0 0
    %208 = vmatprep.subr.bf16.mxu0 0
    %209 = vmatpush1.bf16.msra.mxu0 0
    %210 = vmatprep.subr.bf16.mxu0 0
    %211 = vmatpush1.bf16.msra.mxu0 0
    %212 = vmatprep.subr.bf16.mxu0 0
    %213 = vmatpush1.bf16.msra.mxu0 0
    %214 = vmatprep.subr.bf16.mxu0 0
    %215 = vmatpush1.bf16.msra.mxu0 0
    %216 = vmatprep.subr.bf16.mxu0 0
    %217 = vmatpush1.bf16.msra.mxu0 0
    %218 = vmatprep.subr.bf16.mxu0 0
    %219 = vmatpush1.bf16.msra.mxu0 0
    %220 = vmatprep.subr.bf16.mxu0 0
    %221 = vmatpush1.bf16.msra.mxu0 0
    %222 = vmatprep.subr.bf16.mxu0 0
    %223 = vmatpush1.bf16.msra.mxu0 0
    %224 = vmatprep.subr.bf16.mxu0 0
    %225 = vmatpush1.bf16.msra.mxu0 0
    %226 = vmatprep.subr.bf16.mxu0 0
    %227 = vmatpush1.bf16.msra.mxu0 0
    %228 = vmatprep.mubr.bf16.mxu0 0
    %229 = vmatmul.mubr.bf16.gmra.mrb[0].mxu0 %v173
    %v230 = vpop.f32.mrb[0].mxu0
    %v231 = vadd.f32 %v163, %v230
    %v232 = vpop.f32.mrb[0].mxu0
    %v233 = vpop.f32.mrb[0].mxu0
    %v234 = vadd.f32 %v163, %v233
    %v235 = vpop.f32.mrb[0].mxu0
    %236 = vmatprep.mubr.bf16.mxu0 0
    %237 = vmatmul.mubr.bf16.gmra.mrb[0].mxu0 %v176
    %v238 = vpop.f32.mrb[0].mxu0
    %v239 = vadd.f32 %v163, %v238
    %v240 = vpop.f32.mrb[0].mxu0
    %v241 = vpop.f32.mrb[0].mxu0
    %v242 = vadd.f32 %v163, %v241
    %v243 = vpop.f32.mrb[0].mxu0
    %244 = vmatprep.mubr.bf16.mxu0 0
    %245 = vmatmul.mubr.bf16.gmra.mrb[0].mxu0 %v179
    %v246 = vpop.f32.mrb[0].mxu0
    %v247 = vadd.f32 %v163, %v246
    %v248 = vpop.f32.mrb[0].mxu0
    %v249 = vpop.f32.mrb[0].mxu0
    %v250 = vadd.f32 %v163, %v249
    %v251 = vpop.f32.mrb[0].mxu0
    %252 = vmatprep.mubr.bf16.mxu0 0
    %253 = vmatmul.mubr.bf16.gmra.mrb[0].mxu0 %v182
    %v254 = vpop.f32.mrb[0].mxu0
    %v255 = vadd.f32 %v163, %v254
    %v256 = vpop.f32.mrb[0].mxu0
    %v257 = vpop.f32.mrb[0].mxu0
    %v258 = vadd.f32 %v163, %v257
    %v259 = vpop.f32.mrb[0].mxu0
    %260 = vmatprep.mubr.bf16.mxu0 0
    %261 = vmatmul.mubr.bf16.gmra.mrb[0].mxu0 %v185
    %v262 = vpop.f32.mrb[0].mxu0
    %v263 = vadd.f32 %v163, %v262
    %v264 = vpop.f32.mrb[0].mxu0
    %v265 = vpop.f32.mrb[0].mxu0
    %v266 = vadd.f32 %v163, %v265
    %v267 = vpop.f32.mrb[0].mxu0
    %268 = vmatprep.mubr.bf16.mxu0 0
    %269 = vmatmul.mubr.bf16.gmra.mrb[0].mxu0 %v188
    %v270 = vpop.f32.mrb[0].mxu0
    %v271 = vadd.f32 %v163, %v270
    %v272 = vpop.f32.mrb[0].mxu0
    %v273 = vpop.f32.mrb[0].mxu0
    %v274 = vadd.f32 %v163, %v273
    %v275 = vpop.f32.mrb[0].mxu0
    %276 = vmatprep.mubr.bf16.mxu0 0
    %277 = vmatmul.mubr.bf16.gmra.mrb[0].mxu0 %v191
    %v278 = vpop.f32.mrb[0].mxu0
    %v279 = vadd.f32 %v163, %v278
    %v280 = vpop.f32.mrb[0].mxu0
    %v281 = vpop.f32.mrb[0].mxu0
    %v282 = vadd.f32 %v163, %v281
    %v283 = vpop.f32.mrb[0].mxu0
    %284 = vmatprep.mubr.bf16.mxu0 0
    %285 = vmatmul.mubr.bf16.gmra.mrb[0].mxu0 %v194
    %v286 = vpop.f32.mrb[0].mxu0
    %v287 = vadd.f32 %v163, %v286
    %v288 = vpop.f32.mrb[0].mxu0
    %v289 = vpop.f32.mrb[0].mxu0
    %v290 = vadd.f32 %v163, %v289
    %v291 = vpop.f32.mrb[0].mxu0
    %292 = vdwg.mxu0
    %293 = vst [vmem:[#allocation2] sm:$0xff] %v231
    %294 = vst [vmem:[#allocation2 + $0x8] sm:$0xff] %v234
    %295 = vst [vmem:[#allocation2 + $0x10] sm:$0xff] %v239
    %296 = vst [vmem:[#allocation2 + $0x18] sm:$0xff] %v242
    %297 = vst [vmem:[#allocation2 + $0x20] sm:$0xff] %v247
    %298 = vst [vmem:[#allocation2 + $0x28] sm:$0xff] %v250
    %299 = vst [vmem:[#allocation2 + $0x30] sm:$0xff] %v255
    %300 = vst [vmem:[#allocation2 + $0x38] sm:$0xff] %v258
    %301 = vst [vmem:[#allocation2 + $0x40] sm:$0xff] %v263
    %302 = vst [vmem:[#allocation2 + $0x48] sm:$0xff] %v266
    %303 = vst [vmem:[#allocation2 + $0x50] sm:$0xff] %v271
    %304 = vst [vmem:[#allocation2 + $0x58] sm:$0xff] %v274
    %305 = vst [vmem:[#allocation2 + $0x60] sm:$0xff] %v279
    %306 = vst [vmem:[#allocation2 + $0x68] sm:$0xff] %v282
    %307 = vst [vmem:[#allocation2 + $0x70] sm:$0xff] %v287
    %308 = vst [vmem:[#allocation2 + $0x78] sm:$0xff] %v290
    %v309 = vld [vmem:[#allocation2] sm:$0xff]
    %v310 = vld [vmem:[#allocation2 + $0x8] sm:$0xff]
    %v311 = vld [vmem:[#allocation9] sm:$0xf]
    %v312 = vld [vmem:[#allocation9 + $0x4] sm:$0xf]
    %v313 = vld [vmem:[#allocation9 + $0x8] sm:$0xf]
    %v314 = vld [vmem:[#allocation9 + $0xc] sm:$0xf]
    %v319 = vunpack.c.l.b16 %v311
    %v320 = vunpack.c.l.b16 %v312
    %v321 = vunpack.c.l.b16 %v313
    %v322 = vunpack.c.l.b16 %v314
    %v323 = vpack.c.b16 %v320, %v319
    %v324 = vpack.c.b16 %v322, %v321
    %vm327 = vcmask 261120
    %v329 = vsel %vm327, 0, 0
    %331 = vmatprep.subr.bf16.mxu0 0
    %332 = vmatpush1.bf16.msra.mxu0 %v323
    %333 = vmatprep.subr.bf16.mxu0 0
    %334 = vmatpush1.bf16.msra.mxu0 %v324
    %335 = vmatprep.subr.bf16.mxu0 0
    %336 = vmatpush1.bf16.msra.mxu0 0
    %337 = vmatprep.subr.bf16.mxu0 0
    %338 = vmatpush1.bf16.msra.mxu0 0
    %339 = vmatprep.subr.bf16.mxu0 0
    %340 = vmatpush1.bf16.msra.mxu0 0
    %341 = vmatprep.subr.bf16.mxu0 0
    %342 = vmatpush1.bf16.msra.mxu0 0
    %343 = vmatprep.subr.bf16.mxu0 0
    %344 = vmatpush1.bf16.msra.mxu0 0
    %345 = vmatprep.subr.bf16.mxu0 0
    %346 = vmatpush1.bf16.msra.mxu0 0
    %347 = vmatprep.subr.bf16.mxu0 0
    %348 = vmatpush1.bf16.msra.mxu0 0
    %349 = vmatprep.subr.bf16.mxu0 0
    %350 = vmatpush1.bf16.msra.mxu0 0
    %351 = vmatprep.subr.bf16.mxu0 0
    %352 = vmatpush1.bf16.msra.mxu0 0
    %353 = vmatprep.subr.bf16.mxu0 0
    %354 = vmatpush1.bf16.msra.mxu0 0
    %355 = vmatprep.subr.bf16.mxu0 0
    %356 = vmatpush1.bf16.msra.mxu0 0
    %357 = vmatprep.subr.bf16.mxu0 0
    %358 = vmatpush1.bf16.msra.mxu0 0
    %359 = vmatprep.subr.bf16.mxu0 0
    %360 = vmatpush1.bf16.msra.mxu0 0
    %361 = vmatprep.subr.bf16.mxu0 0
    %362 = vmatpush1.bf16.msra.mxu0 0
    %363 = vmatprep.mubr.bf16.mxu0 0
    %364 = vmatmul.mubr.bf16.gmra.mrb[0].mxu0 %v329
    %v365 = vpop.f32.mrb[0].mxu0
    %v366 = vadd.f32 0.0, %v365
    %v367 = vpop.f32.mrb[0].mxu0
    %v368 = vpop.f32.mrb[0].mxu0
    %v369 = vadd.f32 0.0, %v368
    %v370 = vpop.f32.mrb[0].mxu0
    %371 = vdwg.mxu0
    %v372 = vadd.f32 %v309, %v366
    %v373 = vadd.f32 %v310, %v369
    %v374 = vxor.u32 %v372, 2147483648
    %v375 = vxor.u32 %v373, 2147483648
    %v376 = vmul.f32 %v374, 1.442695
    %v377 = vpow.pop %v376
    %v378 = vmul.f32 %v375, 1.442695
    %v379 = vpow.pop %v378
    %v380 = vadd.f32 %v377, 1.0
    %v381 = vadd.f32 %v379, 1.0
    %v382 = vrcp.pop %v380
    %v383 = vmul.f32 1.0, %v382
    %v384 = vrcp.pop %v381
    %v385 = vmul.f32 1.0, %v384
    %v386 = vtanh.pop %v372
    %v387 = vtanh.pop %v373
    %v388 = vmul.f32 %v383, 0.0
    %v389 = vmul.f32 %v385, 0.0
    %392 = vrot.lane.b32.xlu0 %v386, 32
    %v393 = vpop.permute.xlu0 %392
    %394 = vrot.lane.b32.xlu0 %v387, 32
    %v395 = vpop.permute.xlu0 %394
    %v398 = vmul.f32 %v383, %v393
    %v399 = vmul.f32 %v385, %v395
    %402 = vrot.lane.b32.xlu0 %v398, 32
    %v403 = vpop.permute.xlu0 %402
    %404 = vrot.lane.b32.xlu0 %v399, 32
    %v405 = vpop.permute.xlu0 %404
    %v408 = vadd.f32 %v388, %v403
    %v409 = vadd.f32 %v389, %v405
    %v410 = vtanh.pop %v408
    %v411 = vtanh.pop %v409
    %414 = vrot.lane.b32.xlu0 %v410, 32
    %v415 = vpop.permute.xlu0 %414
    %416 = vrot.lane.b32.xlu0 %v411, 32
    %v417 = vpop.permute.xlu0 %416
    %v420 = vmul.f32 %v383, %v415
    %v421 = vmul.f32 %v385, %v417
    %v422 = vpack.c.bf16 %v421, %v420
    %424 = vrot.lane.b32.xlu0 %v422, 64
    %v425 = vpop.permute.xlu0 %424
    %427 = vst.msk [vmem:[#allocation3] sm:$0xff] %vm327, %v425
    %v428 = vld [vmem:[#allocation2 + $0x10] sm:$0xff]
    %v429 = vld [vmem:[#allocation2 + $0x18] sm:$0xff]
    %v430 = vld [vmem:[#allocation9] sm:$0xf]
    %v431 = vld [vmem:[#allocation9 + $0x4] sm:$0xf]
    %v432 = vld [vmem:[#allocation9 + $0x8] sm:$0xf]
    %v433 = vld [vmem:[#allocation9 + $0xc] sm:$0xf]
    %v438 = vunpack.c.l.b16 %v430
    %v439 = vunpack.c.l.b16 %v431
    %v440 = vunpack.c.l.b16 %v432
    %v441 = vunpack.c.l.b16 %v433
    %v442 = vpack.c.b16 %v439, %v438
    %v443 = vpack.c.b16 %v441, %v440
    %v447 = vsel %vm327, %v425, 0
    %449 = vmatprep.subr.bf16.mxu0 0
    %450 = vmatpush1.bf16.msra.mxu0 %v442
    %451 = vmatprep.subr.bf16.mxu0 0
    %452 = vmatpush1.bf16.msra.mxu0 %v443
    %453 = vmatprep.subr.bf16.mxu0 0
    %454 = vmatpush1.bf16.msra.mxu0 0
    %455 = vmatprep.subr.bf16.mxu0 0
    %456 = vmatpush1.bf16.msra.mxu0 0
    %457 = vmatprep.subr.bf16.mxu0 0
    %458 = vmatpush1.bf16.msra.mxu0 0
    %459 = vmatprep.subr.bf16.mxu0 0
    %460 = vmatpush1.bf16.msra.mxu0 0
    %461 = vmatprep.subr.bf16.mxu0 0
    %462 = vmatpush1.bf16.msra.mxu0 0
    %463 = vmatprep.subr.bf16.mxu0 0
    %464 = vmatpush1.bf16.msra.mxu0 0
    %465 = vmatprep.subr.bf16.mxu0 0
    %466 = vmatpush1.bf16.msra.mxu0 0
    %467 = vmatprep.subr.bf16.mxu0 0
    %468 = vmatpush1.bf16.msra.mxu0 0
    %469 = vmatprep.subr.bf16.mxu0 0
    %470 = vmatpush1.bf16.msra.mxu0 0
    %471 = vmatprep.subr.bf16.mxu0 0
    %472 = vmatpush1.bf16.msra.mxu0 0
    %473 = vmatprep.subr.bf16.mxu0 0
    %474 = vmatpush1.bf16.msra.mxu0 0
    %475 = vmatprep.subr.bf16.mxu0 0
    %476 = vmatpush1.bf16.msra.mxu0 0
    %477 = vmatprep.subr.bf16.mxu0 0
    %478 = vmatpush1.bf16.msra.mxu0 0
    %479 = vmatprep.subr.bf16.mxu0 0
    %480 = vmatpush1.bf16.msra.mxu0 0
    %481 = vmatprep.mubr.bf16.mxu0 0
    %482 = vmatmul.mubr.bf16.gmra.mrb[0].mxu0 %v447
    %v483 = vpop.f32.mrb[0].mxu0
    %v484 = vadd.f32 0.0, %v483
    %v485 = vpop.f32.mrb[0].mxu0
    %v486 = vpop.f32.mrb[0].mxu0
    %v487 = vadd.f32 0.0, %v486
    %v488 = vpop.f32.mrb[0].mxu0
    %489 = vdwg.mxu0
    %v490 = vadd.f32 %v428, %v484
    %v491 = vadd.f32 %v429, %v487
    %v492 = vxor.u32 %v490, 2147483648
    %v493 = vxor.u32 %v491, 2147483648
    %v494 = vmul.f32 %v492, 1.442695
    %v495 = vpow.pop %v494
    %v496 = vmul.f32 %v493, 1.442695
    %v497 = vpow.pop %v496
    %v498 = vadd.f32 %v495, 1.0
    %v499 = vadd.f32 %v497, 1.0
    %v500 = vrcp.pop %v498
    %v501 = vmul.f32 1.0, %v500
    %v502 = vrcp.pop %v499
    %v503 = vmul.f32 1.0, %v502
    %v504 = vtanh.pop %v490
    %v505 = vtanh.pop %v491
    %v506 = vmul.f32 %v501, %v408
    %v507 = vmul.f32 %v503, %v409
    %510 = vrot.lane.b32.xlu0 %v504, 32
    %v511 = vpop.permute.xlu0 %510
    %512 = vrot.lane.b32.xlu0 %v505, 32
    %v513 = vpop.permute.xlu0 %512
    %v516 = vmul.f32 %v501, %v511
    %v517 = vmul.f32 %v503, %v513
    %520 = vrot.lane.b32.xlu0 %v516, 32
    %v521 = vpop.permute.xlu0 %520
    %522 = vrot.lane.b32.xlu0 %v517, 32
    %v523 = vpop.permute.xlu0 %522
    %v526 = vadd.f32 %v506, %v521
    %v527 = vadd.f32 %v507, %v523
    %v528 = vtanh.pop %v526
    %v529 = vtanh.pop %v527
    %532 = vrot.lane.b32.xlu0 %v528, 32
    %v533 = vpop.permute.xlu0 %532
    %534 = vrot.lane.b32.xlu0 %v529, 32
    %v535 = vpop.permute.xlu0 %534
    %v538 = vmul.f32 %v501, %v533
    %v539 = vmul.f32 %v503, %v535
    %v540 = vpack.c.bf16 %v539, %v538
    %542 = vrot.lane.b32.xlu0 %v540, 64
    %v543 = vpop.permute.xlu0 %542
    %545 = vst.msk [vmem:[#allocation3 + $0x8] sm:$0xff] %vm327, %v543
    %v546 = vld [vmem:[#allocation2 + $0x20] sm:$0xff]
    %v547 = vld [vmem:[#allocation2 + $0x28] sm:$0xff]
    %v548 = vld [vmem:[#allocation9] sm:$0xf]
    %v549 = vld [vmem:[#allocation9 + $0x4] sm:$0xf]
    %v550 = vld [vmem:[#allocation9 + $0x8] sm:$0xf]
    %v551 = vld [vmem:[#allocation9 + $0xc] sm:$0xf]
    %v556 = vunpack.c.l.b16 %v548
    %v557 = vunpack.c.l.b16 %v549
    %v558 = vunpack.c.l.b16 %v550
    %v559 = vunpack.c.l.b16 %v551
    %v560 = vpack.c.b16 %v557, %v556
    %v561 = vpack.c.b16 %v559, %v558
    %v565 = vsel %vm327, %v543, 0
    %567 = vmatprep.subr.bf16.mxu0 0
    %568 = vmatpush1.bf16.msra.mxu0 %v560
    %569 = vmatprep.subr.bf16.mxu0 0
    %570 = vmatpush1.bf16.msra.mxu0 %v561
    %571 = vmatprep.subr.bf16.mxu0 0
    %572 = vmatpush1.bf16.msra.mxu0 0
    %573 = vmatprep.subr.bf16.mxu0 0
    %574 = vmatpush1.bf16.msra.mxu0 0
    %575 = vmatprep.subr.bf16.mxu0 0
    %576 = vmatpush1.bf16.msra.mxu0 0
    %577 = vmatprep.subr.bf16.mxu0 0
    %578 = vmatpush1.bf16.msra.mxu0 0
    %579 = vmatprep.subr.bf16.mxu0 0
    %580 = vmatpush1.bf16.msra.mxu0 0
    %581 = vmatprep.subr.bf16.mxu0 0
    %582 = vmatpush1.bf16.msra.mxu0 0
    %583 = vmatprep.subr.bf16.mxu0 0
    %584 = vmatpush1.bf16.msra.mxu0 0
    %585 = vmatprep.subr.bf16.mxu0 0
    %586 = vmatpush1.bf16.msra.mxu0 0
    %587 = vmatprep.subr.bf16.mxu0 0
    %588 = vmatpush1.bf16.msra.mxu0 0
    %589 = vmatprep.subr.bf16.mxu0 0
    %590 = vmatpush1.bf16.msra.mxu0 0
    %591 = vmatprep.subr.bf16.mxu0 0
    %592 = vmatpush1.bf16.msra.mxu0 0
    %593 = vmatprep.subr.bf16.mxu0 0
    %594 = vmatpush1.bf16.msra.mxu0 0
    %595 = vmatprep.subr.bf16.mxu0 0
    %596 = vmatpush1.bf16.msra.mxu0 0
    %597 = vmatprep.subr.bf16.mxu0 0
    %598 = vmatpush1.bf16.msra.mxu0 0
    %599 = vmatprep.mubr.bf16.mxu0 0
    %600 = vmatmul.mubr.bf16.gmra.mrb[0].mxu0 %v565
    %v601 = vpop.f32.mrb[0].mxu0
    %v602 = vadd.f32 0.0, %v601
    %v603 = vpop.f32.mrb[0].mxu0
    %v604 = vpop.f32.mrb[0].mxu0
    %v605 = vadd.f32 0.0, %v604
    %v606 = vpop.f32.mrb[0].mxu0
    %607 = vdwg.mxu0
    %v608 = vadd.f32 %v546, %v602
    %v609 = vadd.f32 %v547, %v605
    %v610 = vxor.u32 %v608, 2147483648
    %v611 = vxor.u32 %v609, 2147483648
    %v612 = vmul.f32 %v610, 1.442695
    %v613 = vpow.pop %v612
    %v614 = vmul.f32 %v611, 1.442695
    %v615 = vpow.pop %v614
    %v616 = vadd.f32 %v613, 1.0
    %v617 = vadd.f32 %v615, 1.0
    %v618 = vrcp.pop %v616
    %v619 = vmul.f32 1.0, %v618
    %v620 = vrcp.pop %v617
    %v621 = vmul.f32 1.0, %v620
    %v622 = vtanh.pop %v608
    %v623 = vtanh.pop %v609
    %v624 = vmul.f32 %v619, %v526
    %v625 = vmul.f32 %v621, %v527
    %628 = vrot.lane.b32.xlu0 %v622, 32
    %v629 = vpop.permute.xlu0 %628
    %630 = vrot.lane.b32.xlu0 %v623, 32
    %v631 = vpop.permute.xlu0 %630
    %v634 = vmul.f32 %v619, %v629
    %v635 = vmul.f32 %v621, %v631
    %638 = vrot.lane.b32.xlu0 %v634, 32
    %v639 = vpop.permute.xlu0 %638
    %640 = vrot.lane.b32.xlu0 %v635, 32
    %v641 = vpop.permute.xlu0 %640
    %v644 = vadd.f32 %v624, %v639
    %v645 = vadd.f32 %v625, %v641
    %v646 = vtanh.pop %v644
    %v647 = vtanh.pop %v645
    %650 = vrot.lane.b32.xlu0 %v646, 32
    %v651 = vpop.permute.xlu0 %650
    %652 = vrot.lane.b32.xlu0 %v647, 32
    %v653 = vpop.permute.xlu0 %652
    %v656 = vmul.f32 %v619, %v651
    %v657 = vmul.f32 %v621, %v653
    %v658 = vpack.c.bf16 %v657, %v656
    %660 = vrot.lane.b32.xlu0 %v658, 64
    %v661 = vpop.permute.xlu0 %660
    %663 = vst.msk [vmem:[#allocation3 + $0x10] sm:$0xff] %vm327, %v661
    %v664 = vld [vmem:[#allocation2 + $0x30] sm:$0xff]
    %v665 = vld [vmem:[#allocation2 + $0x38] sm:$0xff]
    %v666 = vld [vmem:[#allocation9] sm:$0xf]
    %v667 = vld [vmem:[#allocation9 + $0x4] sm:$0xf]
    %v668 = vld [vmem:[#allocation9 + $0x8] sm:$0xf]
    %v669 = vld [vmem:[#allocation9 + $0xc] sm:$0xf]
    %v674 = vunpack.c.l.b16 %v666
    %v675 = vunpack.c.l.b16 %v667
    %v676 = vunpack.c.l.b16 %v668
    %v677 = vunpack.c.l.b16 %v669
    %v678 = vpack.c.b16 %v675, %v674
    %v679 = vpack.c.b16 %v677, %v676
    %v683 = vsel %vm327, %v661, 0
    %685 = vmatprep.subr.bf16.mxu0 0
    %686 = vmatpush1.bf16.msra.mxu0 %v678
    %687 = vmatprep.subr.bf16.mxu0 0
    %688 = vmatpush1.bf16.msra.mxu0 %v679
    %689 = vmatprep.subr.bf16.mxu0 0
    %690 = vmatpush1.bf16.msra.mxu0 0
    %691 = vmatprep.subr.bf16.mxu0 0
    %692 = vmatpush1.bf16.msra.mxu0 0
    %693 = vmatprep.subr.bf16.mxu0 0
    %694 = vmatpush1.bf16.msra.mxu0 0
    %695 = vmatprep.subr.bf16.mxu0 0
    %696 = vmatpush1.bf16.msra.mxu0 0
    %697 = vmatprep.subr.bf16.mxu0 0
    %698 = vmatpush1.bf16.msra.mxu0 0
    %699 = vmatprep.subr.bf16.mxu0 0
    %700 = vmatpush1.bf16.msra.mxu0 0
    %701 = vmatprep.subr.bf16.mxu0 0
    %702 = vmatpush1.bf16.msra.mxu0 0
    %703 = vmatprep.subr.bf16.mxu0 0
    %704 = vmatpush1.bf16.msra.mxu0 0
    %705 = vmatprep.subr.bf16.mxu0 0
    %706 = vmatpush1.bf16.msra.mxu0 0
    %707 = vmatprep.subr.bf16.mxu0 0
    %708 = vmatpush1.bf16.msra.mxu0 0
    %709 = vmatprep.subr.bf16.mxu0 0
    %710 = vmatpush1.bf16.msra.mxu0 0
    %711 = vmatprep.subr.bf16.mxu0 0
    %712 = vmatpush1.bf16.msra.mxu0 0
    %713 = vmatprep.subr.bf16.mxu0 0
    %714 = vmatpush1.bf16.msra.mxu0 0
    %715 = vmatprep.subr.bf16.mxu0 0
    %716 = vmatpush1.bf16.msra.mxu0 0
    %717 = vmatprep.mubr.bf16.mxu0 0
    %718 = vmatmul.mubr.bf16.gmra.mrb[0].mxu0 %v683
    %v719 = vpop.f32.mrb[0].mxu0
    %v720 = vadd.f32 0.0, %v719
    %v721 = vpop.f32.mrb[0].mxu0
    %v722 = vpop.f32.mrb[0].mxu0
    %v723 = vadd.f32 0.0, %v722
    %v724 = vpop.f32.mrb[0].mxu0
    %725 = vdwg.mxu0
    %v726 = vadd.f32 %v664, %v720
    %v727 = vadd.f32 %v665, %v723
    %v728 = vxor.u32 %v726, 2147483648
    %v729 = vxor.u32 %v727, 2147483648
    %v730 = vmul.f32 %v728, 1.442695
    %v731 = vpow.pop %v730
    %v732 = vmul.f32 %v729, 1.442695
    %v733 = vpow.pop %v732
    %v734 = vadd.f32 %v731, 1.0
    %v735 = vadd.f32 %v733, 1.0
    %v736 = vrcp.pop %v734
    %v737 = vmul.f32 1.0, %v736
    %v738 = vrcp.pop %v735
    %v739 = vmul.f32 1.0, %v738
    %v740 = vtanh.pop %v726
    %v741 = vtanh.pop %v727
    %v742 = vmul.f32 %v737, %v644
    %v743 = vmul.f32 %v739, %v645
    %746 = vrot.lane.b32.xlu0 %v740, 32
    %v747 = vpop.permute.xlu0 %746
    %748 = vrot.lane.b32.xlu0 %v741, 32
    %v749 = vpop.permute.xlu0 %748
    %v752 = vmul.f32 %v737, %v747
    %v753 = vmul.f32 %v739, %v749
    %756 = vrot.lane.b32.xlu0 %v752, 32
    %v757 = vpop.permute.xlu0 %756
    %758 = vrot.lane.b32.xlu0 %v753, 32
    %v759 = vpop.permute.xlu0 %758
    %v762 = vadd.f32 %v742, %v757
    %v763 = vadd.f32 %v743, %v759
    %v764 = vtanh.pop %v762
    %v765 = vtanh.pop %v763
    %768 = vrot.lane.b32.xlu0 %v764, 32
    %v769 = vpop.permute.xlu0 %768
    %770 = vrot.lane.b32.xlu0 %v765, 32
    %v771 = vpop.permute.xlu0 %770
    %v774 = vmul.f32 %v737, %v769
    %v775 = vmul.f32 %v739, %v771
    %v776 = vpack.c.bf16 %v775, %v774
    %778 = vrot.lane.b32.xlu0 %v776, 64
    %v779 = vpop.permute.xlu0 %778
    %781 = vst.msk [vmem:[#allocation3 + $0x18] sm:$0xff] %vm327, %v779
    %v782 = vld [vmem:[#allocation2 + $0x40] sm:$0xff]
    %v783 = vld [vmem:[#allocation2 + $0x48] sm:$0xff]
    %v784 = vld [vmem:[#allocation9] sm:$0xf]
    %v785 = vld [vmem:[#allocation9 + $0x4] sm:$0xf]
    %v786 = vld [vmem:[#allocation9 + $0x8] sm:$0xf]
    %v787 = vld [vmem:[#allocation9 + $0xc] sm:$0xf]
    %v792 = vunpack.c.l.b16 %v784
    %v793 = vunpack.c.l.b16 %v785
    %v794 = vunpack.c.l.b16 %v786
    %v795 = vunpack.c.l.b16 %v787
    %v796 = vpack.c.b16 %v793, %v792
    %v797 = vpack.c.b16 %v795, %v794
    %v801 = vsel %vm327, %v779, 0
    %803 = vmatprep.subr.bf16.mxu0 0
    %804 = vmatpush1.bf16.msra.mxu0 %v796
    %805 = vmatprep.subr.bf16.mxu0 0
    %806 = vmatpush1.bf16.msra.mxu0 %v797
    %807 = vmatprep.subr.bf16.mxu0 0
    %808 = vmatpush1.bf16.msra.mxu0 0
    %809 = vmatprep.subr.bf16.mxu0 0
    %810 = vmatpush1.bf16.msra.mxu0 0
    %811 = vmatprep.subr.bf16.mxu0 0
    %812 = vmatpush1.bf16.msra.mxu0 0
    %813 = vmatprep.subr.bf16.mxu0 0
    %814 = vmatpush1.bf16.msra.mxu0 0
    %815 = vmatprep.subr.bf16.mxu0 0
    %816 = vmatpush1.bf16.msra.mxu0 0
    %817 = vmatprep.subr.bf16.mxu0 0
    %818 = vmatpush1.bf16.msra.mxu0 0
    %819 = vmatprep.subr.bf16.mxu0 0
    %820 = vmatpush1.bf16.msra.mxu0 0
    %821 = vmatprep.subr.bf16.mxu0 0
    %822 = vmatpush1.bf16.msra.mxu0 0
    %823 = vmatprep.subr.bf16.mxu0 0
    %824 = vmatpush1.bf16.msra.mxu0 0
    %825 = vmatprep.subr.bf16.mxu0 0
    %826 = vmatpush1.bf16.msra.mxu0 0
    %827 = vmatprep.subr.bf16.mxu0 0
    %828 = vmatpush1.bf16.msra.mxu0 0
    %829 = vmatprep.subr.bf16.mxu0 0
    %830 = vmatpush1.bf16.msra.mxu0 0
    %831 = vmatprep.subr.bf16.mxu0 0
    %832 = vmatpush1.bf16.msra.mxu0 0
    %833 = vmatprep.subr.bf16.mxu0 0
    %834 = vmatpush1.bf16.msra.mxu0 0
    %835 = vmatprep.mubr.bf16.mxu0 0
    %836 = vmatmul.mubr.bf16.gmra.mrb[0].mxu0 %v801
    %v837 = vpop.f32.mrb[0].mxu0
    %v838 = vadd.f32 0.0, %v837
    %v839 = vpop.f32.mrb[0].mxu0
    %v840 = vpop.f32.mrb[0].mxu0
    %v841 = vadd.f32 0.0, %v840
    %v842 = vpop.f32.mrb[0].mxu0
    %843 = vdwg.mxu0
    %v844 = vadd.f32 %v782, %v838
    %v845 = vadd.f32 %v783, %v841
    %v846 = vxor.u32 %v844, 2147483648
    %v847 = vxor.u32 %v845, 2147483648
    %v848 = vmul.f32 %v846, 1.442695
    %v849 = vpow.pop %v848
    %v850 = vmul.f32 %v847, 1.442695
    %v851 = vpow.pop %v850
    %v852 = vadd.f32 %v849, 1.0
    %v853 = vadd.f32 %v851, 1.0
    %v854 = vrcp.pop %v852
    %v855 = vmul.f32 1.0, %v854
    %v856 = vrcp.pop %v853
    %v857 = vmul.f32 1.0, %v856
    %v858 = vtanh.pop %v844
    %v859 = vtanh.pop %v845
    %v860 = vmul.f32 %v855, %v762
    %v861 = vmul.f32 %v857, %v763
    %864 = vrot.lane.b32.xlu0 %v858, 32
    %v865 = vpop.permute.xlu0 %864
    %866 = vrot.lane.b32.xlu0 %v859, 32
    %v867 = vpop.permute.xlu0 %866
    %v870 = vmul.f32 %v855, %v865
    %v871 = vmul.f32 %v857, %v867
    %874 = vrot.lane.b32.xlu0 %v870, 32
    %v875 = vpop.permute.xlu0 %874
    %876 = vrot.lane.b32.xlu0 %v871, 32
    %v877 = vpop.permute.xlu0 %876
    %v880 = vadd.f32 %v860, %v875
    %v881 = vadd.f32 %v861, %v877
    %v882 = vtanh.pop %v880
    %v883 = vtanh.pop %v881
    %886 = vrot.lane.b32.xlu0 %v882, 32
    %v887 = vpop.permute.xlu0 %886
    %888 = vrot.lane.b32.xlu0 %v883, 32
    %v889 = vpop.permute.xlu0 %888
    %v892 = vmul.f32 %v855, %v887
    %v893 = vmul.f32 %v857, %v889
    %v894 = vpack.c.bf16 %v893, %v892
    %896 = vrot.lane.b32.xlu0 %v894, 64
    %v897 = vpop.permute.xlu0 %896
    %899 = vst.msk [vmem:[#allocation3 + $0x20] sm:$0xff] %vm327, %v897
    %v900 = vld [vmem:[#allocation2 + $0x50] sm:$0xff]
    %v901 = vld [vmem:[#allocation2 + $0x58] sm:$0xff]
    %v902 = vld [vmem:[#allocation9] sm:$0xf]
    %v903 = vld [vmem:[#allocation9 + $0x4] sm:$0xf]
    %v904 = vld [vmem:[#allocation9 + $0x8] sm:$0xf]
    %v905 = vld [vmem:[#allocation9 + $0xc] sm:$0xf]
    %v910 = vunpack.c.l.b16 %v902
    %v911 = vunpack.c.l.b16 %v903
    %v912 = vunpack.c.l.b16 %v904
    %v913 = vunpack.c.l.b16 %v905
    %v914 = vpack.c.b16 %v911, %v910
    %v915 = vpack.c.b16 %v913, %v912
    %v919 = vsel %vm327, %v897, 0
    %921 = vmatprep.subr.bf16.mxu0 0
    %922 = vmatpush1.bf16.msra.mxu0 %v914
    %923 = vmatprep.subr.bf16.mxu0 0
    %924 = vmatpush1.bf16.msra.mxu0 %v915
    %925 = vmatprep.subr.bf16.mxu0 0
    %926 = vmatpush1.bf16.msra.mxu0 0
    %927 = vmatprep.subr.bf16.mxu0 0
    %928 = vmatpush1.bf16.msra.mxu0 0
    %929 = vmatprep.subr.bf16.mxu0 0
    %930 = vmatpush1.bf16.msra.mxu0 0
    %931 = vmatprep.subr.bf16.mxu0 0
    %932 = vmatpush1.bf16.msra.mxu0 0
    %933 = vmatprep.subr.bf16.mxu0 0
    %934 = vmatpush1.bf16.msra.mxu0 0
    %935 = vmatprep.subr.bf16.mxu0 0
    %936 = vmatpush1.bf16.msra.mxu0 0
    %937 = vmatprep.subr.bf16.mxu0 0
    %938 = vmatpush1.bf16.msra.mxu0 0
    %939 = vmatprep.subr.bf16.mxu0 0
    %940 = vmatpush1.bf16.msra.mxu0 0
    %941 = vmatprep.subr.bf16.mxu0 0
    %942 = vmatpush1.bf16.msra.mxu0 0
    %943 = vmatprep.subr.bf16.mxu0 0
    %944 = vmatpush1.bf16.msra.mxu0 0
    %945 = vmatprep.subr.bf16.mxu0 0
    %946 = vmatpush1.bf16.msra.mxu0 0
    %947 = vmatprep.subr.bf16.mxu0 0
    %948 = vmatpush1.bf16.msra.mxu0 0
    %949 = vmatprep.subr.bf16.mxu0 0
    %950 = vmatpush1.bf16.msra.mxu0 0
    %951 = vmatprep.subr.bf16.mxu0 0
    %952 = vmatpush1.bf16.msra.mxu0 0
    %953 = vmatprep.mubr.bf16.mxu0 0
    %954 = vmatmul.mubr.bf16.gmra.mrb[0].mxu0 %v919
    %v955 = vpop.f32.mrb[0].mxu0
    %v956 = vadd.f32 0.0, %v955
    %v957 = vpop.f32.mrb[0].mxu0
    %v958 = vpop.f32.mrb[0].mxu0
    %v959 = vadd.f32 0.0, %v958
    %v960 = vpop.f32.mrb[0].mxu0
    %961 = vdwg.mxu0
    %v962 = vadd.f32 %v900, %v956
    %v963 = vadd.f32 %v901, %v959
    %v964 = vxor.u32 %v962, 2147483648
    %v965 = vxor.u32 %v963, 2147483648
    %v966 = vmul.f32 %v964, 1.442695
    %v967 = vpow.pop %v966
    %v968 = vmul.f32 %v965, 1.442695
    %v969 = vpow.pop %v968
    %v970 = vadd.f32 %v967, 1.0
    %v971 = vadd.f32 %v969, 1.0
    %v972 = vrcp.pop %v970
    %v973 = vmul.f32 1.0, %v972
    %v974 = vrcp.pop %v971
    %v975 = vmul.f32 1.0, %v974
    %v976 = vtanh.pop %v962
    %v977 = vtanh.pop %v963
    %v978 = vmul.f32 %v973, %v880
    %v979 = vmul.f32 %v975, %v881
    %982 = vrot.lane.b32.xlu0 %v976, 32
    %v983 = vpop.permute.xlu0 %982
    %984 = vrot.lane.b32.xlu0 %v977, 32
    %v985 = vpop.permute.xlu0 %984
    %v988 = vmul.f32 %v973, %v983
    %v989 = vmul.f32 %v975, %v985
    %992 = vrot.lane.b32.xlu0 %v988, 32
    %v993 = vpop.permute.xlu0 %992
    %994 = vrot.lane.b32.xlu0 %v989, 32
    %v995 = vpop.permute.xlu0 %994
    %v998 = vadd.f32 %v978, %v993
    %v999 = vadd.f32 %v979, %v995
    %v1000 = vtanh.pop %v998
    %v1001 = vtanh.pop %v999
    %1004 = vrot.lane.b32.xlu0 %v1000, 32
    %v1005 = vpop.permute.xlu0 %1004
    %1006 = vrot.lane.b32.xlu0 %v1001, 32
    %v1007 = vpop.permute.xlu0 %1006
    %v1010 = vmul.f32 %v973, %v1005
    %v1011 = vmul.f32 %v975, %v1007
    %v1012 = vpack.c.bf16 %v1011, %v1010
    %1014 = vrot.lane.b32.xlu0 %v1012, 64
    %v1015 = vpop.permute.xlu0 %1014
    %1017 = vst.msk [vmem:[#allocation3 + $0x28] sm:$0xff] %vm327, %v1015
    %v1018 = vld [vmem:[#allocation2 + $0x60] sm:$0xff]
    %v1019 = vld [vmem:[#allocation2 + $0x68] sm:$0xff]
    %v1020 = vld [vmem:[#allocation9] sm:$0xf]
    %v1021 = vld [vmem:[#allocation9 + $0x4] sm:$0xf]
    %v1022 = vld [vmem:[#allocation9 + $0x8] sm:$0xf]
    %v1023 = vld [vmem:[#allocation9 + $0xc] sm:$0xf]
    %v1028 = vunpack.c.l.b16 %v1020
    %v1029 = vunpack.c.l.b16 %v1021
    %v1030 = vunpack.c.l.b16 %v1022
    %v1031 = vunpack.c.l.b16 %v1023
    %v1032 = vpack.c.b16 %v1029, %v1028
    %v1033 = vpack.c.b16 %v1031, %v1030
    %v1037 = vsel %vm327, %v1015, 0
    %1039 = vmatprep.subr.bf16.mxu0 0
    %1040 = vmatpush1.bf16.msra.mxu0 %v1032
    %1041 = vmatprep.subr.bf16.mxu0 0
    %1042 = vmatpush1.bf16.msra.mxu0 %v1033
    %1043 = vmatprep.subr.bf16.mxu0 0
    %1044 = vmatpush1.bf16.msra.mxu0 0
    %1045 = vmatprep.subr.bf16.mxu0 0
    %1046 = vmatpush1.bf16.msra.mxu0 0
    %1047 = vmatprep.subr.bf16.mxu0 0
    %1048 = vmatpush1.bf16.msra.mxu0 0
    %1049 = vmatprep.subr.bf16.mxu0 0
    %1050 = vmatpush1.bf16.msra.mxu0 0
    %1051 = vmatprep.subr.bf16.mxu0 0
    %1052 = vmatpush1.bf16.msra.mxu0 0
    %1053 = vmatprep.subr.bf16.mxu0 0
    %1054 = vmatpush1.bf16.msra.mxu0 0
    %1055 = vmatprep.subr.bf16.mxu0 0
    %1056 = vmatpush1.bf16.msra.mxu0 0
    %1057 = vmatprep.subr.bf16.mxu0 0
    %1058 = vmatpush1.bf16.msra.mxu0 0
    %1059 = vmatprep.subr.bf16.mxu0 0
    %1060 = vmatpush1.bf16.msra.mxu0 0
    %1061 = vmatprep.subr.bf16.mxu0 0
    %1062 = vmatpush1.bf16.msra.mxu0 0
    %1063 = vmatprep.subr.bf16.mxu0 0
    %1064 = vmatpush1.bf16.msra.mxu0 0
    %1065 = vmatprep.subr.bf16.mxu0 0
    %1066 = vmatpush1.bf16.msra.mxu0 0
    %1067 = vmatprep.subr.bf16.mxu0 0
    %1068 = vmatpush1.bf16.msra.mxu0 0
    %1069 = vmatprep.subr.bf16.mxu0 0
    %1070 = vmatpush1.bf16.msra.mxu0 0
    %1071 = vmatprep.mubr.bf16.mxu0 0
    %1072 = vmatmul.mubr.bf16.gmra.mrb[0].mxu0 %v1037
    %v1073 = vpop.f32.mrb[0].mxu0
    %v1074 = vadd.f32 0.0, %v1073
    %v1075 = vpop.f32.mrb[0].mxu0
    %v1076 = vpop.f32.mrb[0].mxu0
    %v1077 = vadd.f32 0.0, %v1076
    %v1078 = vpop.f32.mrb[0].mxu0
    %1079 = vdwg.mxu0
    %v1080 = vadd.f32 %v1018, %v1074
    %v1081 = vadd.f32 %v1019, %v1077
    %v1082 = vxor.u32 %v1080, 2147483648
    %v1083 = vxor.u32 %v1081, 2147483648
    %v1084 = vmul.f32 %v1082, 1.442695
    %v1085 = vpow.pop %v1084
    %v1086 = vmul.f32 %v1083, 1.442695
    %v1087 = vpow.pop %v1086
    %v1088 = vadd.f32 %v1085, 1.0
    %v1089 = vadd.f32 %v1087, 1.0
    %v1090 = vrcp.pop %v1088
    %v1091 = vmul.f32 1.0, %v1090
    %v1092 = vrcp.pop %v1089
    %v1093 = vmul.f32 1.0, %v1092
    %v1094 = vtanh.pop %v1080
    %v1095 = vtanh.pop %v1081
    %v1096 = vmul.f32 %v1091, %v998
    %v1097 = vmul.f32 %v1093, %v999
    %1100 = vrot.lane.b32.xlu0 %v1094, 32
    %v1101 = vpop.permute.xlu0 %1100
    %1102 = vrot.lane.b32.xlu0 %v1095, 32
    %v1103 = vpop.permute.xlu0 %1102
    %v1106 = vmul.f32 %v1091, %v1101
    %v1107 = vmul.f32 %v1093, %v1103
    %1110 = vrot.lane.b32.xlu0 %v1106, 32
    %v1111 = vpop.permute.xlu0 %1110
    %1112 = vrot.lane.b32.xlu0 %v1107, 32
    %v1113 = vpop.permute.xlu0 %1112
    %v1116 = vadd.f32 %v1096, %v1111
    %v1117 = vadd.f32 %v1097, %v1113
    %v1118 = vtanh.pop %v1116
    %v1119 = vtanh.pop %v1117
    %1122 = vrot.lane.b32.xlu0 %v1118, 32
    %v1123 = vpop.permute.xlu0 %1122
    %1124 = vrot.lane.b32.xlu0 %v1119, 32
    %v1125 = vpop.permute.xlu0 %1124
    %v1128 = vmul.f32 %v1091, %v1123
    %v1129 = vmul.f32 %v1093, %v1125
    %v1130 = vpack.c.bf16 %v1129, %v1128
    %1132 = vrot.lane.b32.xlu0 %v1130, 64
    %v1133 = vpop.permute.xlu0 %1132
    %1135 = vst.msk [vmem:[#allocation3 + $0x30] sm:$0xff] %vm327, %v1133
    %v1136 = vld [vmem:[#allocation2 + $0x70] sm:$0xff]
    %v1137 = vld [vmem:[#allocation2 + $0x78] sm:$0xff]
    %v1138 = vld [vmem:[#allocation9] sm:$0xf]
    %v1139 = vld [vmem:[#allocation9 + $0x4] sm:$0xf]
    %v1140 = vld [vmem:[#allocation9 + $0x8] sm:$0xf]
    %v1141 = vld [vmem:[#allocation9 + $0xc] sm:$0xf]
    %v1146 = vunpack.c.l.b16 %v1138
    %v1147 = vunpack.c.l.b16 %v1139
    %v1148 = vunpack.c.l.b16 %v1140
    %v1149 = vunpack.c.l.b16 %v1141
    %v1150 = vpack.c.b16 %v1147, %v1146
    %v1151 = vpack.c.b16 %v1149, %v1148
    %v1155 = vsel %vm327, %v1133, 0
    %1157 = vmatprep.subr.bf16.mxu0 0
    %1158 = vmatpush1.bf16.msra.mxu0 %v1150
    %1159 = vmatprep.subr.bf16.mxu0 0
    %1160 = vmatpush1.bf16.msra.mxu0 %v1151
    %1161 = vmatprep.subr.bf16.mxu0 0
    %1162 = vmatpush1.bf16.msra.mxu0 0
    %1163 = vmatprep.subr.bf16.mxu0 0
    %1164 = vmatpush1.bf16.msra.mxu0 0
    %1165 = vmatprep.subr.bf16.mxu0 0
    %1166 = vmatpush1.bf16.msra.mxu0 0
    %1167 = vmatprep.subr.bf16.mxu0 0
    %1168 = vmatpush1.bf16.msra.mxu0 0
    %1169 = vmatprep.subr.bf16.mxu0 0
    %1170 = vmatpush1.bf16.msra.mxu0 0
    %1171 = vmatprep.subr.bf16.mxu0 0
    %1172 = vmatpush1.bf16.msra.mxu0 0
    %1173 = vmatprep.subr.bf16.mxu0 0
    %1174 = vmatpush1.bf16.msra.mxu0 0
    %1175 = vmatprep.subr.bf16.mxu0 0
    %1176 = vmatpush1.bf16.msra.mxu0 0
    %1177 = vmatprep.subr.bf16.mxu0 0
    %1178 = vmatpush1.bf16.msra.mxu0 0
    %1179 = vmatprep.subr.bf16.mxu0 0
    %1180 = vmatpush1.bf16.msra.mxu0 0
    %1181 = vmatprep.subr.bf16.mxu0 0
    %1182 = vmatpush1.bf16.msra.mxu0 0
    %1183 = vmatprep.subr.bf16.mxu0 0
    %1184 = vmatpush1.bf16.msra.mxu0 0
    %1185 = vmatprep.subr.bf16.mxu0 0
    %1186 = vmatpush1.bf16.msra.mxu0 0
    %1187 = vmatprep.subr.bf16.mxu0 0
    %1188 = vmatpush1.bf16.msra.mxu0 0
    %1189 = vmatprep.mubr.bf16.mxu0 0
    %1190 = vmatmul.mubr.bf16.gmra.mrb[0].mxu0 %v1155
    %v1191 = vpop.f32.mrb[0].mxu0
    %v1192 = vadd.f32 0.0, %v1191
    %v1193 = vpop.f32.mrb[0].mxu0
    %v1194 = vpop.f32.mrb[0].mxu0
    %v1195 = vadd.f32 0.0, %v1194
    %v1196 = vpop.f32.mrb[0].mxu0
    %1197 = vdwg.mxu0
    %v1198 = vadd.f32 %v1136, %v1192
    %v1199 = vadd.f32 %v1137, %v1195
    %v1200 = vxor.u32 %v1198, 2147483648
    %v1201 = vxor.u32 %v1199, 2147483648
    %v1202 = vmul.f32 %v1200, 1.442695
    %v1203 = vpow.pop %v1202
    %v1204 = vmul.f32 %v1201, 1.442695
    %v1205 = vpow.pop %v1204
    %v1206 = vadd.f32 %v1203, 1.0
    %v1207 = vadd.f32 %v1205, 1.0
    %v1208 = vrcp.pop %v1206
    %v1209 = vmul.f32 1.0, %v1208
    %v1210 = vrcp.pop %v1207
    %v1211 = vmul.f32 1.0, %v1210
    %v1212 = vtanh.pop %v1198
    %v1213 = vtanh.pop %v1199
    %v1214 = vmul.f32 %v1209, %v1116
    %v1215 = vmul.f32 %v1211, %v1117
    %1218 = vrot.lane.b32.xlu0 %v1212, 32
    %v1219 = vpop.permute.xlu0 %1218
    %1220 = vrot.lane.b32.xlu0 %v1213, 32
    %v1221 = vpop.permute.xlu0 %1220
    %v1224 = vmul.f32 %v1209, %v1219
    %v1225 = vmul.f32 %v1211, %v1221
    %1228 = vrot.lane.b32.xlu0 %v1224, 32
    %v1229 = vpop.permute.xlu0 %1228
    %1230 = vrot.lane.b32.xlu0 %v1225, 32
    %v1231 = vpop.permute.xlu0 %1230
    %v1234 = vadd.f32 %v1214, %v1229
    %v1235 = vadd.f32 %v1215, %v1231
    %v1236 = vtanh.pop %v1234
    %v1237 = vtanh.pop %v1235
    %1240 = vrot.lane.b32.xlu0 %v1236, 32
    %v1241 = vpop.permute.xlu0 %1240
    %1242 = vrot.lane.b32.xlu0 %v1237, 32
    %v1243 = vpop.permute.xlu0 %1242
    %v1246 = vmul.f32 %v1209, %v1241
    %v1247 = vmul.f32 %v1211, %v1243
    %v1248 = vpack.c.bf16 %v1247, %v1246
    %1250 = vrot.lane.b32.xlu0 %v1248, 64
    %v1251 = vpop.permute.xlu0 %1250
    %1253 = vst.msk [vmem:[#allocation3 + $0x38] sm:$0xff] %vm327, %v1251
    %v1254 = vld [vmem:[#allocation3] sm:$0xff]
    %v1255 = vld [vmem:[#allocation3 + $0x8] sm:$0xff]
    %v1256 = vld [vmem:[#allocation3 + $0x10] sm:$0xff]
    %v1257 = vld [vmem:[#allocation3 + $0x18] sm:$0xff]
    %v1258 = vld [vmem:[#allocation3 + $0x20] sm:$0xff]
    %v1259 = vld [vmem:[#allocation3 + $0x28] sm:$0xff]
    %v1260 = vld [vmem:[#allocation3 + $0x30] sm:$0xff]
    %v1261 = vld [vmem:[#allocation3 + $0x38] sm:$0xff]
    %v1262 = vld [vmem:[#allocation12] sm:$0xf]
    %v1263 = vld [vmem:[#allocation12 + $0x4] sm:$0xf]
    %v1264 = vld [vmem:[#allocation12 + $0x8] sm:$0xf]
    %v1265 = vld [vmem:[#allocation12 + $0xc] sm:$0xf]
    %v1266 = vld [vmem:[#allocation13] sm:$0x1]
    %v1268 = vlaneseq
    %v1269 = vshrl.u32 %v1268, 7
    %v1270 = vsub.s32 0, %v1269
    %v1271 = vrot.slane %v1266, %v1270
    %v1277 = vunpack.c.l.b16 %v1262
    %v1278 = vunpack.c.l.b16 %v1263
    %v1279 = vunpack.c.l.b16 %v1264
    %v1280 = vunpack.c.l.b16 %v1265
    %v1281 = vpack.c.b16 %v1278, %v1277
    %v1282 = vpack.c.b16 %v1280, %v1279
    %v1286 = vsel %vm327, %v1254, 0
    %v1289 = vsel %vm327, %v1255, 0
    %v1292 = vsel %vm327, %v1256, 0
    %v1295 = vsel %vm327, %v1257, 0
    %v1298 = vsel %vm327, %v1258, 0
    %v1301 = vsel %vm327, %v1259, 0
    %v1304 = vsel %vm327, %v1260, 0
    %v1307 = vsel %vm327, %v1261, 0
    %1309 = vmatprep.subr.bf16.mxu0 0
    %1310 = vmatpush1.bf16.msra.mxu0 %v1281
    %1311 = vmatprep.subr.bf16.mxu0 0
    %1312 = vmatpush1.bf16.msra.mxu0 %v1282
    %1313 = vmatprep.subr.bf16.mxu0 0
    %1314 = vmatpush1.bf16.msra.mxu0 0
    %1315 = vmatprep.subr.bf16.mxu0 0
    %1316 = vmatpush1.bf16.msra.mxu0 0
    %1317 = vmatprep.subr.bf16.mxu0 0
    %1318 = vmatpush1.bf16.msra.mxu0 0
    %1319 = vmatprep.subr.bf16.mxu0 0
    %1320 = vmatpush1.bf16.msra.mxu0 0
    %1321 = vmatprep.subr.bf16.mxu0 0
    %1322 = vmatpush1.bf16.msra.mxu0 0
    %1323 = vmatprep.subr.bf16.mxu0 0
    %1324 = vmatpush1.bf16.msra.mxu0 0
    %1325 = vmatprep.subr.bf16.mxu0 0
    %1326 = vmatpush1.bf16.msra.mxu0 0
    %1327 = vmatprep.subr.bf16.mxu0 0
    %1328 = vmatpush1.bf16.msra.mxu0 0
    %1329 = vmatprep.subr.bf16.mxu0 0
    %1330 = vmatpush1.bf16.msra.mxu0 0
    %1331 = vmatprep.subr.bf16.mxu0 0
    %1332 = vmatpush1.bf16.msra.mxu0 0
    %1333 = vmatprep.subr.bf16.mxu0 0
    %1334 = vmatpush1.bf16.msra.mxu0 0
    %1335 = vmatprep.subr.bf16.mxu0 0
    %1336 = vmatpush1.bf16.msra.mxu0 0
    %1337 = vmatprep.subr.bf16.mxu0 0
    %1338 = vmatpush1.bf16.msra.mxu0 0
    %1339 = vmatprep.subr.bf16.mxu0 0
    %1340 = vmatpush1.bf16.msra.mxu0 0
    %1341 = vmatprep.mubr.bf16.mxu0 0
    %1342 = vmatmul.mubr.bf16.gmra.mrb[0].mxu0 %v1286
    %v1343 = vpop.f32.mrb[0].mxu0
    %v1344 = vadd.f32 %v1271, %v1343
    %v1345 = vpop.f32.mrb[0].mxu0
    %v1346 = vpop.f32.mrb[0].mxu0
    %v1347 = vadd.f32 %v1271, %v1346
    %v1348 = vpop.f32.mrb[0].mxu0
    %1349 = vmatprep.mubr.bf16.mxu0 0
    %1350 = vmatmul.mubr.bf16.gmra.mrb[0].mxu0 %v1289
    %v1351 = vpop.f32.mrb[0].mxu0
    %v1352 = vadd.f32 %v1271, %v1351
    %v1353 = vpop.f32.mrb[0].mxu0
    %v1354 = vpop.f32.mrb[0].mxu0
    %v1355 = vadd.f32 %v1271, %v1354
    %v1356 = vpop.f32.mrb[0].mxu0
    %1357 = vmatprep.mubr.bf16.mxu0 0
    %1358 = vmatmul.mubr.bf16.gmra.mrb[0].mxu0 %v1292
    %v1359 = vpop.f32.mrb[0].mxu0
    %v1360 = vadd.f32 %v1271, %v1359
    %v1361 = vpop.f32.mrb[0].mxu0
    %v1362 = vpop.f32.mrb[0].mxu0
    %v1363 = vadd.f32 %v1271, %v1362
    %v1364 = vpop.f32.mrb[0].mxu0
    %1365 = vmatprep.mubr.bf16.mxu0 0
    %1366 = vmatmul.mubr.bf16.gmra.mrb[0].mxu0 %v1295
    %v1367 = vpop.f32.mrb[0].mxu0
    %v1368 = vadd.f32 %v1271, %v1367
    %v1369 = vpop.f32.mrb[0].mxu0
    %v1370 = vpop.f32.mrb[0].mxu0
    %v1371 = vadd.f32 %v1271, %v1370
    %v1372 = vpop.f32.mrb[0].mxu0
    %1373 = vmatprep.mubr.bf16.mxu0 0
    %1374 = vmatmul.mubr.bf16.gmra.mrb[0].mxu0 %v1298
    %v1375 = vpop.f32.mrb[0].mxu0
    %v1376 = vadd.f32 %v1271, %v1375
    %v1377 = vpop.f32.mrb[0].mxu0
    %v1378 = vpop.f32.mrb[0].mxu0
    %v1379 = vadd.f32 %v1271, %v1378
    %v1380 = vpop.f32.mrb[0].mxu0
    %1381 = vmatprep.mubr.bf16.mxu0 0
    %1382 = vmatmul.mubr.bf16.gmra.mrb[0].mxu0 %v1301
    %v1383 = vpop.f32.mrb[0].mxu0
    %v1384 = vadd.f32 %v1271, %v1383
    %v1385 = vpop.f32.mrb[0].mxu0
    %v1386 = vpop.f32.mrb[0].mxu0
    %v1387 = vadd.f32 %v1271, %v1386
    %v1388 = vpop.f32.mrb[0].mxu0
    %1389 = vmatprep.mubr.bf16.mxu0 0
    %1390 = vmatmul.mubr.bf16.gmra.mrb[0].mxu0 %v1304
    %v1391 = vpop.f32.mrb[0].mxu0
    %v1392 = vadd.f32 %v1271, %v1391
    %v1393 = vpop.f32.mrb[0].mxu0
    %v1394 = vpop.f32.mrb[0].mxu0
    %v1395 = vadd.f32 %v1271, %v1394
    %v1396 = vpop.f32.mrb[0].mxu0
    %1397 = vmatprep.mubr.bf16.mxu0 0
    %1398 = vmatmul.mubr.bf16.gmra.mrb[0].mxu0 %v1307
    %v1399 = vpop.f32.mrb[0].mxu0
    %v1400 = vadd.f32 %v1271, %v1399
    %v1401 = vpop.f32.mrb[0].mxu0
    %v1402 = vpop.f32.mrb[0].mxu0
    %v1403 = vadd.f32 %v1271, %v1402
    %v1404 = vpop.f32.mrb[0].mxu0
    %1405 = vdwg.mxu0
    %v1406 = vsel %vm171, %v1344, 0.0
    %v1407 = vsel %vm171, %v1352, 0.0
    %v1408 = vadd.f32 %v1406, %v1407
    %v1409 = vsel %vm171, %v1360, 0.0
    %v1410 = vadd.f32 %v1408, %v1409
    %v1411 = vsel %vm171, %v1368, 0.0
    %v1412 = vadd.f32 %v1410, %v1411
    %v1413 = vsel %vm171, %v1376, 0.0
    %v1414 = vadd.f32 %v1412, %v1413
    %v1415 = vsel %vm171, %v1384, 0.0
    %v1416 = vadd.f32 %v1414, %v1415
    %v1417 = vsel %vm171, %v1392, 0.0
    %v1418 = vadd.f32 %v1416, %v1417
    %v1419 = vsel %vm171, %v1400, 0.0
    %v1420 = vadd.f32 %v1418, %v1419
    %1421 = vadd.xlane.f32.xlu0 %v1420
    %v1422 = vpop.xlane.xlu0 %1421
    %v1423 = vrot.slane %v1422, 4
    %v1424 = vadd.f32 %v1422, %v1423
    %v1425 = vrot.slane %v1424, 2
    %v1426 = vadd.f32 %v1424, %v1425
    %v1427 = vrot.slane %v1426, 1
    %v1428 = vadd.f32 %v1426, %v1427
    %s1429 = vtos %v1428
    %s1430 = smul.f32 %s1429, 0.0009765625
    %v1431 = vstv %s1430
    %v1432 = vsub.f32 %v1344, %v1431
    %v1433 = vsub.f32 %v1352, %v1431
    %v1434 = vsub.f32 %v1360, %v1431
    %v1435 = vsub.f32 %v1368, %v1431
    %v1436 = vsub.f32 %v1376, %v1431
    %v1437 = vsub.f32 %v1384, %v1431
    %v1438 = vsub.f32 %v1392, %v1431
    %v1439 = vsub.f32 %v1400, %v1431
    %v1440 = vmul.f32 %v1432, %v1432
    %v1441 = vmul.f32 %v1433, %v1433
    %v1442 = vmul.f32 %v1434, %v1434
    %v1443 = vmul.f32 %v1435, %v1435
    %v1444 = vmul.f32 %v1436, %v1436
    %v1445 = vmul.f32 %v1437, %v1437
    %v1446 = vmul.f32 %v1438, %v1438
    %v1447 = vmul.f32 %v1439, %v1439
    %v1448 = vsel %vm171, %v1440, 0.0
    %v1449 = vsel %vm171, %v1441, 0.0
    %v1450 = vadd.f32 %v1448, %v1449
    %v1451 = vsel %vm171, %v1442, 0.0
    %v1452 = vadd.f32 %v1450, %v1451
    %v1453 = vsel %vm171, %v1443, 0.0
    %v1454 = vadd.f32 %v1452, %v1453
    %v1455 = vsel %vm171, %v1444, 0.0
    %v1456 = vadd.f32 %v1454, %v1455
    %v1457 = vsel %vm171, %v1445, 0.0
    %v1458 = vadd.f32 %v1456, %v1457
    %v1459 = vsel %vm171, %v1446, 0.0
    %v1460 = vadd.f32 %v1458, %v1459
    %v1461 = vsel %vm171, %v1447, 0.0
    %v1462 = vadd.f32 %v1460, %v1461
    %1463 = vadd.xlane.f32.xlu0 %v1462
    %v1464 = vpop.xlane.xlu0 %1463
    %v1465 = vrot.slane %v1464, 4
    %v1466 = vadd.f32 %v1464, %v1465
    %v1467 = vrot.slane %v1466, 2
    %v1468 = vadd.f32 %v1466, %v1467
    %v1469 = vrot.slane %v1468, 1
    %v1470 = vadd.f32 %v1468, %v1469
    %s1471 = vtos %v1470
    %s1472 = smul.f32 %s1471, 0.0009765625
    %s1473 = sadd.f32 %s1472, 1e-08
    %v1474 = vstv %s1473
    %v1475 = vrsqrt.pop %v1474
    %s1476 = vtos %v1475
    %v1477 = vstv %s1476
    %v1478 = vmul.f32 %v1432, %v1477
    %v1479 = vmul.f32 %v1433, %v1477
    %v1480 = vmul.f32 %v1434, %v1477
    %v1481 = vmul.f32 %v1435, %v1477
    %v1482 = vmul.f32 %v1436, %v1477
    %v1483 = vmul.f32 %v1437, %v1477
    %v1484 = vmul.f32 %v1438, %v1477
    %v1485 = vmul.f32 %v1439, %v1477
    %v1486 = vld [vmem:[#allocation15] sm:$0x1]
    %v1488 = vlaneseq
    %v1489 = vshrl.u32 %v1488, 7
    %v1490 = vsub.s32 0, %v1489
    %v1491 = vrot.slane %v1486, %v1490
    %v1493 = vmul.f32 %v1478, %v1491
    %v1494 = vmul.f32 %v1479, %v1491
    %v1495 = vmul.f32 %v1480, %v1491
    %v1496 = vmul.f32 %v1481, %v1491
    %v1497 = vmul.f32 %v1482, %v1491
    %v1498 = vmul.f32 %v1483, %v1491
    %v1499 = vmul.f32 %v1484, %v1491
    %v1500 = vmul.f32 %v1485, %v1491
    %v1501 = vld [vmem:[#allocation16] sm:$0x1]
    %v1503 = vlaneseq
    %v1504 = vshrl.u32 %v1503, 7
    %v1505 = vsub.s32 0, %v1504
    %v1506 = vrot.slane %v1501, %v1505
    %v1508 = vadd.f32 %v1493, %v1506
    %v1509 = vadd.f32 %v1494, %v1506
    %v1510 = vadd.f32 %v1495, %v1506
    %v1511 = vadd.f32 %v1496, %v1506
    %v1512 = vadd.f32 %v1497, %v1506
    %v1513 = vadd.f32 %v1498, %v1506
    %v1514 = vadd.f32 %v1499, %v1506
    %v1515 = vadd.f32 %v1500, %v1506
    %v1516 = vld [vmem:[#allocation4] sm:$0xff]
    %v1517 = vld [vmem:[#allocation4 + $0x10] sm:$0xff]
    %v1518 = vld [vmem:[#allocation4 + $0x20] sm:$0xff]
    %v1519 = vld [vmem:[#allocation4 + $0x30] sm:$0xff]
    %v1520 = vld [vmem:[#allocation4 + $0x40] sm:$0xff]
    %v1521 = vld [vmem:[#allocation4 + $0x50] sm:$0xff]
    %v1522 = vld [vmem:[#allocation4 + $0x60] sm:$0xff]
    %v1523 = vld [vmem:[#allocation4 + $0x70] sm:$0xff]
    %v1524 = vadd.f32 %v1508, %v1516
    %v1525 = vadd.f32 %v1509, %v1517
    %v1526 = vadd.f32 %v1510, %v1518
    %v1527 = vadd.f32 %v1511, %v1519
    %v1528 = vadd.f32 %v1512, %v1520
    %v1529 = vadd.f32 %v1513, %v1521
    %v1530 = vadd.f32 %v1514, %v1522
    %v1531 = vadd.f32 %v1515, %v1523
    %1532 = vst.msk [vmem:[#allocation18] sm:$0xff] %vm171, %v1524
    %1533 = vst.msk [vmem:[#allocation18 + $0x10] sm:$0xff] %vm171, %v1525
    %1534 = vst.msk [vmem:[#allocation18 + $0x20] sm:$0xff] %vm171, %v1526
    %1535 = vst.msk [vmem:[#allocation18 + $0x30] sm:$0xff] %vm171, %v1527
    %1536 = vst.msk [vmem:[#allocation18 + $0x40] sm:$0xff] %vm171, %v1528
    %1537 = vst.msk [vmem:[#allocation18 + $0x50] sm:$0xff] %vm171, %v1529
    %1538 = vst.msk [vmem:[#allocation18 + $0x60] sm:$0xff] %vm171, %v1530
    %1539 = vst.msk [vmem:[#allocation18 + $0x70] sm:$0xff] %vm171, %v1531
    %v1540 = vsel %vm171, %v1347, 0.0
    %v1541 = vsel %vm171, %v1355, 0.0
    %v1542 = vadd.f32 %v1540, %v1541
    %v1543 = vsel %vm171, %v1363, 0.0
    %v1544 = vadd.f32 %v1542, %v1543
    %v1545 = vsel %vm171, %v1371, 0.0
    %v1546 = vadd.f32 %v1544, %v1545
    %v1547 = vsel %vm171, %v1379, 0.0
    %v1548 = vadd.f32 %v1546, %v1547
    %v1549 = vsel %vm171, %v1387, 0.0
    %v1550 = vadd.f32 %v1548, %v1549
    %v1551 = vsel %vm171, %v1395, 0.0
    %v1552 = vadd.f32 %v1550, %v1551
    %v1553 = vsel %vm171, %v1403, 0.0
    %v1554 = vadd.f32 %v1552, %v1553
    %1555 = vadd.xlane.f32.xlu0 %v1554
    %v1556 = vpop.xlane.xlu0 %1555
    %v1557 = vrot.slane %v1556, 4
    %v1558 = vadd.f32 %v1556, %v1557
    %v1559 = vrot.slane %v1558, 2
    %v1560 = vadd.f32 %v1558, %v1559
    %v1561 = vrot.slane %v1560, 1
    %v1562 = vadd.f32 %v1560, %v1561
    %s1563 = vtos %v1562
    %s1564 = smul.f32 %s1563, 0.0009765625
    %v1565 = vstv %s1564
    %v1566 = vsub.f32 %v1347, %v1565
    %v1567 = vsub.f32 %v1355, %v1565
    %v1568 = vsub.f32 %v1363, %v1565
    %v1569 = vsub.f32 %v1371, %v1565
    %v1570 = vsub.f32 %v1379, %v1565
    %v1571 = vsub.f32 %v1387, %v1565
    %v1572 = vsub.f32 %v1395, %v1565
    %v1573 = vsub.f32 %v1403, %v1565
    %v1574 = vmul.f32 %v1566, %v1566
    %v1575 = vmul.f32 %v1567, %v1567
    %v1576 = vmul.f32 %v1568, %v1568
    %v1577 = vmul.f32 %v1569, %v1569
    %v1578 = vmul.f32 %v1570, %v1570
    %v1579 = vmul.f32 %v1571, %v1571
    %v1580 = vmul.f32 %v1572, %v1572
    %v1581 = vmul.f32 %v1573, %v1573
    %v1582 = vsel %vm171, %v1574, 0.0
    %v1583 = vsel %vm171, %v1575, 0.0
    %v1584 = vadd.f32 %v1582, %v1583
    %v1585 = vsel %vm171, %v1576, 0.0
    %v1586 = vadd.f32 %v1584, %v1585
    %v1587 = vsel %vm171, %v1577, 0.0
    %v1588 = vadd.f32 %v1586, %v1587
    %v1589 = vsel %vm171, %v1578, 0.0
    %v1590 = vadd.f32 %v1588, %v1589
    %v1591 = vsel %vm171, %v1579, 0.0
    %v1592 = vadd.f32 %v1590, %v1591
    %v1593 = vsel %vm171, %v1580, 0.0
    %v1594 = vadd.f32 %v1592, %v1593
    %v1595 = vsel %vm171, %v1581, 0.0
    %v1596 = vadd.f32 %v1594, %v1595
    %1597 = vadd.xlane.f32.xlu0 %v1596
    %v1598 = vpop.xlane.xlu0 %1597
    %v1599 = vrot.slane %v1598, 4
    %v1600 = vadd.f32 %v1598, %v1599
    %v1601 = vrot.slane %v1600, 2
    %v1602 = vadd.f32 %v1600, %v1601
    %v1603 = vrot.slane %v1602, 1
    %v1604 = vadd.f32 %v1602, %v1603
    %s1605 = vtos %v1604
    %s1606 = smul.f32 %s1605, 0.0009765625
    %s1607 = sadd.f32 %s1606, 1e-08
    %v1608 = vstv %s1607
    %v1609 = vrsqrt.pop %v1608
    %s1610 = vtos %v1609
    %v1611 = vstv %s1610
    %v1612 = vmul.f32 %v1566, %v1611
    %v1613 = vmul.f32 %v1567, %v1611
    %v1614 = vmul.f32 %v1568, %v1611
    %v1615 = vmul.f32 %v1569, %v1611
    %v1616 = vmul.f32 %v1570, %v1611
    %v1617 = vmul.f32 %v1571, %v1611
    %v1618 = vmul.f32 %v1572, %v1611
    %v1619 = vmul.f32 %v1573, %v1611
    %v1620 = vld [vmem:[#allocation15] sm:$0x1]
    %v1622 = vlaneseq
    %v1623 = vshrl.u32 %v1622, 7
    %v1624 = vsub.s32 0, %v1623
    %v1625 = vrot.slane %v1620, %v1624
    %v1627 = vmul.f32 %v1612, %v1625
    %v1628 = vmul.f32 %v1613, %v1625
    %v1629 = vmul.f32 %v1614, %v1625
    %v1630 = vmul.f32 %v1615, %v1625
    %v1631 = vmul.f32 %v1616, %v1625
    %v1632 = vmul.f32 %v1617, %v1625
    %v1633 = vmul.f32 %v1618, %v1625
    %v1634 = vmul.f32 %v1619, %v1625
    %v1635 = vld [vmem:[#allocation16] sm:$0x1]
    %v1637 = vlaneseq
    %v1638 = vshrl.u32 %v1637, 7
    %v1639 = vsub.s32 0, %v1638
    %v1640 = vrot.slane %v1635, %v1639
    %v1642 = vadd.f32 %v1627, %v1640
    %v1643 = vadd.f32 %v1628, %v1640
    %v1644 = vadd.f32 %v1629, %v1640
    %v1645 = vadd.f32 %v1630, %v1640
    %v1646 = vadd.f32 %v1631, %v1640
    %v1647 = vadd.f32 %v1632, %v1640
    %v1648 = vadd.f32 %v1633, %v1640
    %v1649 = vadd.f32 %v1634, %v1640
    %v1650 = vld [vmem:[#allocation4 + $0x8] sm:$0xff]
    %v1651 = vld [vmem:[#allocation4 + $0x18] sm:$0xff]
    %v1652 = vld [vmem:[#allocation4 + $0x28] sm:$0xff]
    %v1653 = vld [vmem:[#allocation4 + $0x38] sm:$0xff]
    %v1654 = vld [vmem:[#allocation4 + $0x48] sm:$0xff]
    %v1655 = vld [vmem:[#allocation4 + $0x58] sm:$0xff]
    %v1656 = vld [vmem:[#allocation4 + $0x68] sm:$0xff]
    %v1657 = vld [vmem:[#allocation4 + $0x78] sm:$0xff]
    %v1658 = vadd.f32 %v1642, %v1650
    %v1659 = vadd.f32 %v1643, %v1651
    %v1660 = vadd.f32 %v1644, %v1652
    %v1661 = vadd.f32 %v1645, %v1653
    %v1662 = vadd.f32 %v1646, %v1654
    %v1663 = vadd.f32 %v1647, %v1655
    %v1664 = vadd.f32 %v1648, %v1656
    %v1665 = vadd.f32 %v1649, %v1657
    %1666 = vst.msk [vmem:[#allocation18 + $0x8] sm:$0xff] %vm171, %v1658
    %1667 = vst.msk [vmem:[#allocation18 + $0x18] sm:$0xff] %vm171, %v1659
    %1668 = vst.msk [vmem:[#allocation18 + $0x28] sm:$0xff] %vm171, %v1660
    %1669 = vst.msk [vmem:[#allocation18 + $0x38] sm:$0xff] %vm171, %v1661
    %1670 = vst.msk [vmem:[#allocation18 + $0x48] sm:$0xff] %vm171, %v1662
    %1671 = vst.msk [vmem:[#allocation18 + $0x58] sm:$0xff] %vm171, %v1663
    %1672 = vst.msk [vmem:[#allocation18 + $0x68] sm:$0xff] %vm171, %v1664
    %1673 = vst.msk [vmem:[#allocation18 + $0x78] sm:$0xff] %vm171, %v1665
    // Predicated region
    $region66: #{dual_rnn_block_pallas.2} parent=1 // pred_check
      _
    $region67: #{dual_rnn_block_pallas.2} parent=1 // pred_check_branch
      %1675 = sbr.rel (0) target = $region69
    $region68: #{dual_rnn_block_pallas.2} parent=1 // pred_region
      %s1677 = ssub.s32 2048, 2048
      %1678 = vsyncadd [#allocation6], %s1677
      %s1679 = sshll.u32 [#allocation18], 4
      %s1680 = int_to_ptr.vmem [resolvable:$true] %s1679
      %1685 = dma.vmem_to_hbm [thread:$0]  %s1680, 2048, %s8, [#allocation6], 128, 128, 8
    $region69: #{dual_rnn_block_pallas.2} parent=1 // pred_fallthru
      _
    // Predicated region
    $region70: #{dual_rnn_block_pallas.2} parent=1 // pred_check
      _
    $region71: #{dual_rnn_block_pallas.2} parent=1 // pred_check_branch
      %1687 = sbr.rel (0) target = $region73
    $region72: #{dual_rnn_block_pallas.2} parent=1 // pred_region
      %1688 = dma.done [#allocation6], 2048
    $region73: #{dual_rnn_block_pallas.2} parent=1 // pred_fallthru
      _
    %1689 = vsyncpa [#allocation5], 1
    %1690 = vsyncpa [#allocation8], 1
    %1691 = vsyncpa [#allocation11], 1
    %1692 = vsyncpa [#allocation14], 1
    %1693 = vsyncpa [#allocation17], 1
    %1694 = vsyncpa [#allocation6], 1

</llo_original>
